<compile_context>
chip_gen: v7x
topology: tpu7x:2x2x1
jax: 0.10.0
libtpu: 0.0.40
codegen_flags: <defaults>
</compile_context>

<pallas_src>
import jax
import jax.numpy as jnp
from jax import lax
from jax.experimental import pallas as pl
from jax.experimental.pallas import tpu as pltpu

# ----------------------------- model config ---------------------------------
INPUT_DIM = 4
HIDDEN_DIM = 128
Z_DIM = 32
NUM_CODES = 256
BETA = 0.25          # vqtorch weighting; forward loss value == plain MSE(z, z_q)
BATCH = 256          # demo batch (grid of 2 blocks); scale freely in real use
ROW_BLOCK = 128      # rows per grid step (multiple of 8; 128 suits v5e MXU too)

LANES = 128
INV_SQRT2 = 0.7071067811865476

# --- packed 128-lane weight-slab layout (row offsets, all multiples of 8) ----
EW1_OFF = 0                        # [4,128]   norm folded: ew1 / std^T
EB1_OFF = EW1_OFF + 8              # [1,128]   eb1 - (mean/std) @ ew1
EW2_OFF = EB1_OFF + 8              # [128,128]
EB2_OFF = EW2_OFF + HIDDEN_DIM     # [1,128]
EW3_OFF = EB2_OFF + 8              # [128,128] cols >= Z_DIM zero-padded
EB3_OFF = EW3_OFF + HIDDEN_DIM     # [1,128]   lanes >= Z_DIM zero
DW1_OFF = EB3_OFF + 8              # [128,128] rows >= Z_DIM zero-padded
DB1_OFF = DW1_OFF + LANES          # [1,128]
DW2_OFF = DB1_OFF + 8              # [128,128]
DB2_OFF = DW2_OFF + HIDDEN_DIM     # [1,128]
DW3_OFF = DB2_OFF + 8              # [128,128] denorm folded (dw3*std), cols >= 4 zero
DB3_OFF = DW3_OFF + HIDDEN_DIM     # [1,128]   db3*std + mean, lanes >= 4 zero
CBW_OFF = DB3_OFF + 8              # [256,128] codebook, cols >= Z_DIM zero (for z_q)
W_ROWS  = CBW_OFF + NUM_CODES      # 952 rows total

# --- packed 256-lane codebook-slab layout ------------------------------------
CBT_OFF = 0                        # [128,256] -2 * codebook^T, rows >= Z_DIM zero
CSQ_OFF = CBT_OFF + LANES          # [1,256]   precomputed ||c_k||^2
CB_ROWS = CSQ_OFF + 8              # 136 rows total


def _gelu_exact(x):
    # Matches torch.nn.functional.gelu default (erf-based, exact).
    return 0.5 * x * (1.0 + lax.erf(x * INV_SQRT2))


# ------------------------------ Pallas kernel --------------------------------
def vqvae_jet_kernel(x_ref, w_ref, cb_ref, out_ref):
    x = x_ref[...]                                            # [NB, 4]

    # Zero-cost static views into the packed slabs.
    ew1 = w_ref[pl.ds(EW1_OFF, INPUT_DIM), :]
    eb1 = w_ref[pl.ds(EB1_OFF, 1), :]
    ew2 = w_ref[pl.ds(EW2_OFF, HIDDEN_DIM), :]
    eb2 = w_ref[pl.ds(EB2_OFF, 1), :]
    ew3 = w_ref[pl.ds(EW3_OFF, HIDDEN_DIM), :]
    eb3 = w_ref[pl.ds(EB3_OFF, 1), :]
    dw1 = w_ref[pl.ds(DW1_OFF, LANES), :]
    db1 = w_ref[pl.ds(DB1_OFF, 1), :]
    dw2 = w_ref[pl.ds(DW2_OFF, HIDDEN_DIM), :]
    db2 = w_ref[pl.ds(DB2_OFF, 1), :]
    dw3 = w_ref[pl.ds(DW3_OFF, HIDDEN_DIM), :]
    db3 = w_ref[pl.ds(DB3_OFF, 1), :]
    cb = w_ref[pl.ds(CBW_OFF, NUM_CODES), :]                  # [256, 128], cols >= 32 zero

    cbt_m2 = cb_ref[pl.ds(CBT_OFF, LANES), :]                 # [128, 256] = -2 * codebook^T
    c_sq = cb_ref[pl.ds(CSQ_OFF, 1), :]                       # [1, 256]

    # EncoderJet (FeatureNormJet folded into fc1): 4 -> 128 -> 128 -> 32(pad 128)
    h = _gelu_exact(jnp.dot(x, ew1, preferred_element_type=jnp.float32) + eb1)
    h = _gelu_exact(jnp.dot(h, ew2, preferred_element_type=jnp.float32) + eb2)
    z = jnp.dot(h, ew3, preferred_element_type=jnp.float32) + eb3     # [NB,128], lanes>=32 == 0

    # VectorQuant nearest-code lookup. ||z||^2 dropped (constant per row ->
    # cannot change the argmin); ||c||^2 precomputed; -2 folded into cbt_m2.
    d = c_sq + jnp.dot(z, cbt_m2, preferred_element_type=jnp.float32)  # [NB, 256]
    min_d = jnp.min(d, axis=-1, keepdims=True)                         # [NB, 1]
    iota = lax.broadcasted_iota(jnp.int32, d.shape, 1)                 # [NB, 256]
    idx = jnp.min(jnp.where(d == min_d, iota, NUM_CODES), axis=-1, keepdims=True)
    onehot = (iota == idx).astype(jnp.float32)                         # [NB, 256]
    # z_q = onehot @ codebook -- natural [M,K]x[K,N] MXU matmul (no transpose).
    z_q = jnp.dot(onehot, cb, preferred_element_type=jnp.float32)      # [NB,128], lanes>=32 == 0

    # vqtorch VectorQuant loss: (1-beta)*||sg(z)-zq||^2 + beta*||z-sg(zq)||^2;
    # forward value == mean((z - z_q)^2).  Per-row sum packed into lane INPUT_DIM
    # of the output block; the wrapper reduces it to the scalar loss.
    diff = z - z_q                                                     # padded lanes are 0
    row_sq = jnp.sum(diff * diff, axis=-1, keepdims=True)              # [NB, 1]

    # DecoderJet (denorm folded into fc3): 32(pad 128) -> 128 -> 128 -> 4(pad 128)
    g = _gelu_exact(jnp.dot(z_q, dw1, preferred_element_type=jnp.float32) + db1)
    g = _gelu_exact(jnp.dot(g, dw2, preferred_element_type=jnp.float32) + db2)
    xr = jnp.dot(g, dw3, preferred_element_type=jnp.float32) + db3     # [NB,128], lanes>=4 == 0

    lane = lax.broadcasted_iota(jnp.int32, xr.shape, 1)
    out_ref[...] = xr + jnp.where(lane == INPUT_DIM, row_sq, 0.0)      # loss packed in lane 4


# ------------------------------ host wrapper ---------------------------------
@jax.jit
def vqvae_jet_forward(x, slab_w, slab_cb):
    n = x.shape[0]
    nblk = min(ROW_BLOCK, n)
    assert n % nblk == 0, "batch must be a multiple of the row block (or <= ROW_BLOCK)"

    out_pad = pl.pallas_call(
        vqvae_jet_kernel,
        out_shape=jax.ShapeDtypeStruct((n, LANES), jnp.float32),
        grid=(n // nblk,),
        in_specs=[
            pl.BlockSpec((nblk, INPUT_DIM), lambda i: (i, 0)),
            # Weight slabs: constant block index -> DMA'd once, VMEM-resident
            # across all grid steps.
            pl.BlockSpec((W_ROWS, LANES), lambda i: (0, 0)),
            pl.BlockSpec((CB_ROWS, NUM_CODES), lambda i: (0, 0)),
        ],
        out_specs=pl.BlockSpec((nblk, LANES), lambda i: (i, 0)),
        compiler_params=pltpu.CompilerParams(
            dimension_semantics=("parallel",)),   # 2-TC split on v7x; no-op elsewhere
    )(x, slab_w, slab_cb)

    x_recon = out_pad[:, :INPUT_DIM]
    vq_loss = jnp.sum(out_pad[:, INPUT_DIM]) * (1.0 / (n * Z_DIM))
    return x_recon, vq_loss


# --------------------------- deterministic init -------------------------------
def init_params(key):
    ks = jax.random.split(key, 16)

    def linear(kw, kb, fan_in, fan_out):
        bound = 1.0 / jnp.sqrt(float(fan_in))
        w = jax.random.uniform(kw, (fan_in, fan_out), jnp.float32, -bound, bound)
        b = jax.random.uniform(kb, (1, fan_out), jnp.float32, -bound, bound)
        return w, b

    ew1, eb1 = linear(ks[0], ks[1], INPUT_DIM, HIDDEN_DIM)
    ew2, eb2 = linear(ks[2], ks[3], HIDDEN_DIM, HIDDEN_DIM)
    ew3, eb3 = linear(ks[4], ks[5], HIDDEN_DIM, Z_DIM)
    dw1, db1 = linear(ks[6], ks[7], Z_DIM, HIDDEN_DIM)
    dw2, db2 = linear(ks[8], ks[9], HIDDEN_DIM, HIDDEN_DIM)
    dw3, db3 = linear(ks[10], ks[11], HIDDEN_DIM, INPUT_DIM)

    codebook = jax.random.normal(ks[12], (NUM_CODES, Z_DIM), jnp.float32)

    # external global stats for FeatureNormJet ([1, 4] tensors)
    mean = jax.random.normal(ks[13], (1, INPUT_DIM), jnp.float32)
    std = jax.random.uniform(ks[14], (1, INPUT_DIM), jnp.float32, 0.5, 2.0)

    # TODO(synk): vqtorch VectorQuant's affine_lr/sync_nu/replace_freq only alter
    # training-time codebook statistics; the inference forward is the plain
    # nearest-code lookup implemented here, and vq_loss is returned as the
    # scalar loss value (vqtorch wraps it in a dict).
    return {
        "mean": mean, "std": std,
        "ew1": ew1, "eb1": eb1, "ew2": ew2, "eb2": eb2, "ew3": ew3, "eb3": eb3,
        "codebook": codebook,
        "dw1": dw1, "db1": db1, "dw2": dw2, "db2": db2, "dw3": dw3, "db3": db3,
    }


def pack_params(p):
    """One-time parameter folding + slab packing (host side, NOT per call)."""
    mean, std = p["mean"], p["std"]

    # Fold (x - mean) / std into encoder fc1.
    ew1 = p["ew1"] / std.T
    eb1 = p["eb1"] - (mean / std) @ p["ew1"]
    # Fold x * std + mean into decoder fc3.
    dw3 = p["dw3"] * std
    db3 = p["db3"] * std + mean

    def rpad(a, rows):
        return jnp.pad(a, ((0, rows - a.shape[0]), (0, 0)))

    def cpad(a, cols):
        return jnp.pad(a, ((0, 0), (0, cols - a.shape[1])))

    slab_w = jnp.concatenate([
        rpad(ew1, 8),                      # EW1_OFF
        rpad(eb1, 8),                      # EB1_OFF
        p["ew2"],                          # EW2_OFF
        rpad(p["eb2"], 8),                 # EB2_OFF
        cpad(p["ew3"], LANES),             # EW3_OFF (cols padded 32 -> 128)
        rpad(cpad(p["eb3"], LANES), 8),    # EB3_OFF
        rpad(p["dw1"], LANES),             # DW1_OFF (rows padded 32 -> 128)
        rpad(p["db1"], 8),                 # DB1_OFF
        p["dw2"],                          # DW2_OFF
        rpad(p["db2"], 8),                 # DB2_OFF
        cpad(dw3, LANES),                  # DW3_OFF (cols padded 4 -> 128)
        rpad(cpad(db3, LANES), 8),         # DB3_OFF
        cpad(p["codebook"], LANES),        # CBW_OFF (cols padded 32 -> 128)
    ], axis=0)
    assert slab_w.shape == (W_ROWS, LANES), slab_w.shape

    cbt_m2 = rpad(-2.0 * p["codebook"].T, LANES)               # [128, 256]
    c_sq = jnp.sum(p["codebook"] ** 2, axis=-1)[None, :]       # [1, 256]
    slab_cb = jnp.concatenate([cbt_m2, rpad(c_sq, 8)], axis=0)
    assert slab_cb.shape == (CB_ROWS, NUM_CODES), slab_cb.shape

    return slab_w, slab_cb


# -------------------------- pure-JAX reference check --------------------------
def reference_forward(x, p):
    xn = (x - p["mean"]) / p["std"]
    h = jax.nn.gelu(xn @ p["ew1"] + p["eb1"], approximate=False)
    h = jax.nn.gelu(h @ p["ew2"] + p["eb2"], approximate=False)
    z = h @ p["ew3"] + p["eb3"]
    d = (jnp.sum(z * z, -1, keepdims=True)
         - 2.0 * z @ p["codebook"].T
         + jnp.sum(p["codebook"] ** 2, -1)[None, :])
    idx = jnp.argmin(d, axis=-1)
    z_q = p["codebook"][idx]
    loss = jnp.mean((z - z_q) ** 2)
    g = jax.nn.gelu(z_q @ p["dw1"] + p["db1"], approximate=False)
    g = jax.nn.gelu(g @ p["dw2"] + p["db2"], approximate=False)
    xr = (g @ p["dw3"] + p["db3"]) * p["std"] + p["mean"]
    return xr, loss


if __name__ == "__main__":
    key = jax.random.PRNGKey(0)
    kx, kp = jax.random.split(key)
    x = jax.random.normal(kx, (BATCH, INPUT_DIM), jnp.float32)

    raw = init_params(kp)
    slab_w, slab_cb = pack_params(raw)     # one-time fold + pack

    x_recon, vq_loss = vqvae_jet_forward(x, slab_w, slab_cb)
    jax.block_until_ready((x_recon, vq_loss))

    x_expected, loss_expected = reference_forward(x, raw)
    assert jnp.allclose(x_recon, x_expected, atol=1e-4, rtol=1e-4), "x_recon mismatch"
    assert jnp.allclose(vq_loss, loss_expected, atol=1e-4, rtol=1e-4), "vq_loss mismatch"

    print("KERNEL_OK")
</pallas_src>

<mosaic_0001>
module attributes {stable_mosaic.version = 11 : i64} {
  func.func @vqvae_jet_kernel(%arg0: i32, %arg1: memref<128x4xf32, #tpu.memory_space<vmem>>, %arg2: memref<952x128xf32, #tpu.memory_space<vmem>>, %arg3: memref<136x256xf32, #tpu.memory_space<vmem>>, %arg4: memref<128x128xf32, #tpu.memory_space<vmem>>) attributes {dimension_semantics = [#tpu.dimension_semantics<parallel>], iteration_bounds = array<i64: 2>, scalar_prefetch = 0 : i64, scratch_operands = 0 : i64, tpu.core_type = #tpu.core_type<tc>, window_params = [{transform_indices = @transform_0, window_bounds = array<i64: 128, 4>}, {pipeline_mode = #tpu.pipeline_mode<synchronous>, transform_indices = @transform_1, window_bounds = array<i64: 952, 128>}, {pipeline_mode = #tpu.pipeline_mode<synchronous>, transform_indices = @transform_2, window_bounds = array<i64: 136, 256>}, {transform_indices = @transform_3, window_bounds = array<i64: 128, 128>}]} {
    %c0 = arith.constant 0 : index
    %c0_0 = arith.constant 0 : index
    %0 = vector.load %arg1[%c0, %c0_0] : memref<128x4xf32, #tpu.memory_space<vmem>>, vector<128x4xf32>
    %c0_1 = arith.constant 0 : index
    %c0_2 = arith.constant 0 : index
    %1 = vector.load %arg2[%c0_1, %c0_2] : memref<952x128xf32, #tpu.memory_space<vmem>>, vector<4x128xf32>
    %c8 = arith.constant 8 : index
    %c0_3 = arith.constant 0 : index
    %2 = vector.load %arg2[%c8, %c0_3] : memref<952x128xf32, #tpu.memory_space<vmem>>, vector<1x128xf32>
    %c16 = arith.constant 16 : index
    %c0_4 = arith.constant 0 : index
    %3 = vector.load %arg2[%c16, %c0_4] : memref<952x128xf32, #tpu.memory_space<vmem>>, vector<128x128xf32>
    %c144 = arith.constant 144 : index
    %c0_5 = arith.constant 0 : index
    %4 = vector.load %arg2[%c144, %c0_5] : memref<952x128xf32, #tpu.memory_space<vmem>>, vector<1x128xf32>
    %c152 = arith.constant 152 : index
    %c0_6 = arith.constant 0 : index
    %5 = vector.load %arg2[%c152, %c0_6] : memref<952x128xf32, #tpu.memory_space<vmem>>, vector<128x128xf32>
    %c280 = arith.constant 280 : index
    %c0_7 = arith.constant 0 : index
    %6 = vector.load %arg2[%c280, %c0_7] : memref<952x128xf32, #tpu.memory_space<vmem>>, vector<1x128xf32>
    %c288 = arith.constant 288 : index
    %c0_8 = arith.constant 0 : index
    %7 = vector.load %arg2[%c288, %c0_8] : memref<952x128xf32, #tpu.memory_space<vmem>>, vector<128x128xf32>
    %c416 = arith.constant 416 : index
    %c0_9 = arith.constant 0 : index
    %8 = vector.load %arg2[%c416, %c0_9] : memref<952x128xf32, #tpu.memory_space<vmem>>, vector<1x128xf32>
    %c424 = arith.constant 424 : index
    %c0_10 = arith.constant 0 : index
    %9 = vector.load %arg2[%c424, %c0_10] : memref<952x128xf32, #tpu.memory_space<vmem>>, vector<128x128xf32>
    %c552 = arith.constant 552 : index
    %c0_11 = arith.constant 0 : index
    %10 = vector.load %arg2[%c552, %c0_11] : memref<952x128xf32, #tpu.memory_space<vmem>>, vector<1x128xf32>
    %c560 = arith.constant 560 : index
    %c0_12 = arith.constant 0 : index
    %11 = vector.load %arg2[%c560, %c0_12] : memref<952x128xf32, #tpu.memory_space<vmem>>, vector<128x128xf32>
    %c688 = arith.constant 688 : index
    %c0_13 = arith.constant 0 : index
    %12 = vector.load %arg2[%c688, %c0_13] : memref<952x128xf32, #tpu.memory_space<vmem>>, vector<1x128xf32>
    %c696 = arith.constant 696 : index
    %c0_14 = arith.constant 0 : index
    %13 = vector.load %arg2[%c696, %c0_14] : memref<952x128xf32, #tpu.memory_space<vmem>>, vector<256x128xf32>
    %c0_15 = arith.constant 0 : index
    %c0_16 = arith.constant 0 : index
    %14 = vector.load %arg3[%c0_15, %c0_16] : memref<136x256xf32, #tpu.memory_space<vmem>>, vector<128x256xf32>
    %c128 = arith.constant 128 : index
    %c0_17 = arith.constant 0 : index
    %15 = vector.load %arg3[%c128, %c0_17] : memref<136x256xf32, #tpu.memory_space<vmem>>, vector<1x256xf32>
    %cst = arith.constant dense<0.000000e+00> : vector<128x128xf32>
    %16 = tpu.matmul %0, %1, %cst {dimension_numbers = #tpu.dot_dimension_numbers<[1], [0], [0], [1], [0, 0, 1, 1], [], []>} : vector<128x4xf32>, vector<4x128xf32>, vector<128x128xf32> -> vector<128x128xf32>
    %17 = vector.broadcast %2 : vector<1x128xf32> to vector<128x128xf32>
    %18 = arith.addf %16, %17 : vector<128x128xf32>
    %cst_18 = arith.constant 5.000000e-01 : f32
    %19 = vector.broadcast %cst_18 : f32 to vector<128x128xf32>
    %20 = arith.mulf %19, %18 : vector<128x128xf32>
    %cst_19 = arith.constant 0.707106769 : f32
    %21 = vector.broadcast %cst_19 : f32 to vector<128x128xf32>
    %22 = arith.mulf %18, %21 : vector<128x128xf32>
    %23 = math.erf %22 : vector<128x128xf32>
    %cst_20 = arith.constant 1.000000e+00 : f32
    %24 = vector.broadcast %cst_20 : f32 to vector<128x128xf32>
    %25 = arith.addf %24, %23 : vector<128x128xf32>
    %26 = arith.mulf %20, %25 : vector<128x128xf32>
    %cst_21 = arith.constant dense<0.000000e+00> : vector<128x128xf32>
    %27 = tpu.matmul %26, %3, %cst_21 {dimension_numbers = #tpu.dot_dimension_numbers<[1], [0], [0], [1], [0, 0, 1, 1], [], []>} : vector<128x128xf32>, vector<128x128xf32>, vector<128x128xf32> -> vector<128x128xf32>
    %28 = vector.broadcast %4 : vector<1x128xf32> to vector<128x128xf32>
    %29 = arith.addf %27, %28 : vector<128x128xf32>
    %cst_22 = arith.constant 5.000000e-01 : f32
    %30 = vector.broadcast %cst_22 : f32 to vector<128x128xf32>
    %31 = arith.mulf %30, %29 : vector<128x128xf32>
    %cst_23 = arith.constant 0.707106769 : f32
    %32 = vector.broadcast %cst_23 : f32 to vector<128x128xf32>
    %33 = arith.mulf %29, %32 : vector<128x128xf32>
    %34 = math.erf %33 : vector<128x128xf32>
    %cst_24 = arith.constant 1.000000e+00 : f32
    %35 = vector.broadcast %cst_24 : f32 to vector<128x128xf32>
    %36 = arith.addf %35, %34 : vector<128x128xf32>
    %37 = arith.mulf %31, %36 : vector<128x128xf32>
    %cst_25 = arith.constant dense<0.000000e+00> : vector<128x128xf32>
    %38 = tpu.matmul %37, %5, %cst_25 {dimension_numbers = #tpu.dot_dimension_numbers<[1], [0], [0], [1], [0, 0, 1, 1], [], []>} : vector<128x128xf32>, vector<128x128xf32>, vector<128x128xf32> -> vector<128x128xf32>
    %39 = vector.broadcast %6 : vector<1x128xf32> to vector<128x128xf32>
    %40 = arith.addf %38, %39 : vector<128x128xf32>
    %cst_26 = arith.constant dense<0.000000e+00> : vector<128x256xf32>
    %41 = tpu.matmul %40, %14, %cst_26 {dimension_numbers = #tpu.dot_dimension_numbers<[1], [0], [0], [1], [0, 0, 1, 1], [], []>} : vector<128x128xf32>, vector<128x256xf32>, vector<128x256xf32> -> vector<128x256xf32>
    %42 = vector.broadcast %15 : vector<1x256xf32> to vector<128x256xf32>
    %43 = arith.addf %42, %41 : vector<128x256xf32>
    %cst_27 = arith.constant dense<0x7F800000> : vector<128xf32>
    %44 = vector.multi_reduction <minimumf>, %43, %cst_27 [1] : vector<128x256xf32> to vector<128xf32>
    %45 = vector.shape_cast %44 : vector<128xf32> to vector<128x1xf32>
    %46 = tpu.iota {dimensions = array<i32: 1>} : vector<128x256xi32>
    %47 = vector.broadcast %45 : vector<128x1xf32> to vector<128x256xf32>
    %48 = arith.cmpf oeq, %43, %47 : vector<128x256xf32>
    %c256_i32 = arith.constant 256 : i32
    %49 = vector.broadcast %c256_i32 : i32 to vector<128x256xi32>
    %50 = arith.select %48, %46, %49 : vector<128x256xi1>, vector<128x256xi32>
    %cst_28 = arith.constant dense<2147483647> : vector<128xi32>
    %51 = vector.multi_reduction <minsi>, %50, %cst_28 [1] : vector<128x256xi32> to vector<128xi32>
    %52 = vector.shape_cast %51 : vector<128xi32> to vector<128x1xi32>
    %53 = vector.broadcast %52 : vector<128x1xi32> to vector<128x256xi32>
    %54 = arith.cmpi eq, %46, %53 : vector<128x256xi32>
    %55 = arith.extui %54 : vector<128x256xi1> to vector<128x256xi32>
    %56 = arith.sitofp %55 : vector<128x256xi32> to vector<128x256xf32>
    %cst_29 = arith.constant dense<0.000000e+00> : vector<128x128xf32>
    %57 = tpu.matmul %56, %13, %cst_29 {dimension_numbers = #tpu.dot_dimension_numbers<[1], [0], [0], [1], [0, 0, 1, 1], [], []>} : vector<128x256xf32>, vector<256x128xf32>, vector<128x128xf32> -> vector<128x128xf32>
    %58 = arith.subf %40, %57 : vector<128x128xf32>
    %59 = arith.mulf %58, %58 : vector<128x128xf32>
    %cst_30 = arith.constant dense<0.000000e+00> : vector<128xf32>
    %60 = vector.multi_reduction <add>, %59, %cst_30 [1] : vector<128x128xf32> to vector<128xf32>
    %61 = vector.shape_cast %60 : vector<128xf32> to vector<128x1xf32>
    %cst_31 = arith.constant dense<0.000000e+00> : vector<128x128xf32>
    %62 = tpu.matmul %57, %7, %cst_31 {dimension_numbers = #tpu.dot_dimension_numbers<[1], [0], [0], [1], [0, 0, 1, 1], [], []>} : vector<128x128xf32>, vector<128x128xf32>, vector<128x128xf32> -> vector<128x128xf32>
    %63 = vector.broadcast %8 : vector<1x128xf32> to vector<128x128xf32>
    %64 = arith.addf %62, %63 : vector<128x128xf32>
    %cst_32 = arith.constant 5.000000e-01 : f32
    %65 = vector.broadcast %cst_32 : f32 to vector<128x128xf32>
    %66 = arith.mulf %65, %64 : vector<128x128xf32>
    %cst_33 = arith.constant 0.707106769 : f32
    %67 = vector.broadcast %cst_33 : f32 to vector<128x128xf32>
    %68 = arith.mulf %64, %67 : vector<128x128xf32>
    %69 = math.erf %68 : vector<128x128xf32>
    %cst_34 = arith.constant 1.000000e+00 : f32
    %70 = vector.broadcast %cst_34 : f32 to vector<128x128xf32>
    %71 = arith.addf %70, %69 : vector<128x128xf32>
    %72 = arith.mulf %66, %71 : vector<128x128xf32>
    %cst_35 = arith.constant dense<0.000000e+00> : vector<128x128xf32>
    %73 = tpu.matmul %72, %9, %cst_35 {dimension_numbers = #tpu.dot_dimension_numbers<[1], [0], [0], [1], [0, 0, 1, 1], [], []>} : vector<128x128xf32>, vector<128x128xf32>, vector<128x128xf32> -> vector<128x128xf32>
    %74 = vector.broadcast %10 : vector<1x128xf32> to vector<128x128xf32>
    %75 = arith.addf %73, %74 : vector<128x128xf32>
    %cst_36 = arith.constant 5.000000e-01 : f32
    %76 = vector.broadcast %cst_36 : f32 to vector<128x128xf32>
    %77 = arith.mulf %76, %75 : vector<128x128xf32>
    %cst_37 = arith.constant 0.707106769 : f32
    %78 = vector.broadcast %cst_37 : f32 to vector<128x128xf32>
    %79 = arith.mulf %75, %78 : vector<128x128xf32>
    %80 = math.erf %79 : vector<128x128xf32>
    %cst_38 = arith.constant 1.000000e+00 : f32
    %81 = vector.broadcast %cst_38 : f32 to vector<128x128xf32>
    %82 = arith.addf %81, %80 : vector<128x128xf32>
    %83 = arith.mulf %77, %82 : vector<128x128xf32>
    %cst_39 = arith.constant dense<0.000000e+00> : vector<128x128xf32>
    %84 = tpu.matmul %83, %11, %cst_39 {dimension_numbers = #tpu.dot_dimension_numbers<[1], [0], [0], [1], [0, 0, 1, 1], [], []>} : vector<128x128xf32>, vector<128x128xf32>, vector<128x128xf32> -> vector<128x128xf32>
    %85 = vector.broadcast %12 : vector<1x128xf32> to vector<128x128xf32>
    %86 = arith.addf %84, %85 : vector<128x128xf32>
    %87 = tpu.iota {dimensions = array<i32: 1>} : vector<128x128xi32>
    %c4_i32 = arith.constant 4 : i32
    %88 = vector.broadcast %c4_i32 : i32 to vector<128x128xi32>
    %89 = arith.cmpi eq, %87, %88 : vector<128x128xi32>
    %cst_40 = arith.constant 0.000000e+00 : f32
    %90 = vector.shape_cast %61 : vector<128x1xf32> to vector<128x1xf32>
    %91 = vector.broadcast %90 : vector<128x1xf32> to vector<128x128xf32>
    %92 = vector.broadcast %cst_40 : f32 to vector<128x128xf32>
    %93 = arith.select %89, %91, %92 : vector<128x128xi1>, vector<128x128xf32>
    %94 = arith.addf %86, %93 : vector<128x128xf32>
    %c0_41 = arith.constant 0 : index
    %c0_42 = arith.constant 0 : index
    %95 = vector.load %arg4[%c0_41, %c0_42] : memref<128x128xf32, #tpu.memory_space<vmem>>, vector<128x128xf32>
    tpu.vector_store %arg4[%c0_41, %c0_42], %94 {strides = array<i32>} : memref<128x128xf32, #tpu.memory_space<vmem>>, vector<128x128xf32>,
    return
  }
  func.func @transform_0(%arg0: i32) -> (i32, i32) {
    %c0_i32 = arith.constant 0 : i32
    %c0_i32_0 = arith.constant 0 : i32
    return %arg0, %c0_i32 : i32, i32
  }
  func.func @transform_1(%arg0: i32) -> (i32, i32) {
    %c0_i32 = arith.constant 0 : i32
    %c0_i32_0 = arith.constant 0 : i32
    %c0_i32_1 = arith.constant 0 : i32
    return %c0_i32, %c0_i32_0 : i32, i32
  }
  func.func @transform_2(%arg0: i32) -> (i32, i32) {
    %c0_i32 = arith.constant 0 : i32
    %c0_i32_0 = arith.constant 0 : i32
    %c0_i32_1 = arith.constant 0 : i32
    return %c0_i32, %c0_i32_0 : i32, i32
  }
  func.func @transform_3(%arg0: i32) -> (i32, i32) {
    %c0_i32 = arith.constant 0 : i32
    %c0_i32_0 = arith.constant 0 : i32
    return %arg0, %c0_i32 : i32, i32
  }
}

</mosaic_0001>

<llo_original>
// kernel: vqvae_jet_forward.1
$region0: #{vqvae_jet_forward.1}
  #allocation0 [shape = 'u32[]', space=smem, size = 0x4, offset = 0x4, fixed_abs, tag = 'smem constant byte address 0x4 - core index']
  #allocation1 [shape = 'u32[144,128]{1,0:T(1,128)}', space=vmem, size = 0x12000, scoped, tag = 'internal scratch']
  %s0 = inlined_call_operand.vmem [shape: f32[256,4], index: 0, kind: input, shape index: {}]
  %s1 = inlined_call_operand.hbm [shape: f32[952,128], index: 1, kind: input, shape index: {}]
  %s2 = inlined_call_operand.hbm [shape: f32[136,256], index: 2, kind: input, shape index: {}]
  %s3 = inlined_call_operand.vmem [shape: f32[256,128], index: 3, kind: output, shape index: {}]
  %s4 = sld [smem:[#allocation0]]
  $region53: #{vqvae_jet_forward.1} parent=0
    _
  %s6 = ssub.s32 1, %s4
  %s7 = scalar_select 0, %s6, %s4
  $region1: #{vqvae_jet_forward.1} parent=0
    #allocation2 [shape = 'u8[487424]{0}', space=vmem, size = 0x77000, scoped, tag = 'input window, operand 1, single buffered']
    #allocation3 [shape = 's32[2]{0}', space=sflag, size = 0x8, scoped, tag = 'scoped memory for vqvae_jet_forward.1']
    #allocation4 [shape = 'u8[139264]{0}', space=vmem, size = 0x22000, scoped, tag = 'input window, operand 2, single buffered']
    #allocation5 [shape = 's32[1]{0}', space=sflag, size = 0x4, scoped, tag = 'scoped memory for vqvae_jet_forward.1']
    %8 = vsyncpa [#allocation3], 0
    %9 = vsyncpa [#allocation5], 0
    loop: start=0, step=1, limit=4
    $region2: #{vqvae_jet_forward.1} parent=1 // loop_pre_header
      _
    $region3: #{vqvae_jet_forward.1} parent=1 // loop_header
      %s11 = sphi 0, %s15
      %p12 = scmp.ge.s32.totalorder %s11, 4
      %s21 = sphi 0, %s23
      %s24 = sphi 0, %s21
      %s25 = sphi 0, %s24
      %s41 = sphi 0, %s25
      %s45 = sphi 0, %s45
      %s47 = sphi 0, %s45
      %s48 = sphi 0, %s47
      %s62 = sphi 0, %s48
      %s66 = sphi 0, %s66
      %s68 = sphi 0, %s66
      %s69 = sphi 0, %s68
      %s83 = sphi 0, %s69
      %s89 = sphi 0, %s91
      %s92 = sphi 0, %s89
      %s93 = sphi 0, %s92
      %s109 = sphi 0, %s93
    $region4: #{vqvae_jet_forward.1} parent=1 // loop_header_branch
      %14 = sbr.rel (%p12) target = $region8
    $region5: #{vqvae_jet_forward.1} parent=1 // loop_body
      %s16 = ssub.s32 %s11, 1
      %s17 = ssub.s32 %s11, 2
      %s18 = sadd.s32 %s11, 1
      %s19 = ssub.s32 %s11, %s18
      %p20 = scmp.eq.s32.totalorder %s19, 0
      %s22 = sadd.s32 %s21, 1
      %s23 = scalar_select %p20, %s21, %s22
      %p26 = pneg %p20
      %p27 = scmp.eq.s32.totalorder %s11, 1
      %p28 = por %p26, %p27
      %p29 = scmp.ne.s32.totalorder %s21, %s24
      %p30 = scmp.eq.s32.totalorder %s11, 0
      %p31 = por %p29, %p30
      %p32 = scmp.ne.s32.totalorder %s21, %s24
      %p33 = scmp.eq.s32.totalorder %s16, 1
      %p34 = por %p32, %p33
      %p35 = scmp.ne.s32.totalorder %s24, %s25
      %p36 = scmp.eq.s32.totalorder %s16, 0
      %p37 = por %p35, %p36
      %p38 = scmp.ne.s32.totalorder %s24, %s25
      %p39 = scmp.eq.s32.totalorder %s17, 1
      %p40 = por %p38, %p39
      %p42 = scmp.ne.s32.totalorder %s25, %s41
      %p43 = scmp.eq.s32.totalorder %s17, 0
      %p44 = por %p42, %p43
      %s46 = sadd.s32 %s45, 1
      %p49 = scmp.eq.s32.totalorder %s11, 1
      %p50 = scmp.ne.s32.totalorder %s45, %s47
      %p51 = scmp.eq.s32.totalorder %s11, 0
      %p52 = por %p50, %p51
      %p53 = scmp.ne.s32.totalorder %s45, %s47
      %p54 = scmp.eq.s32.totalorder %s16, 1
      %p55 = por %p53, %p54
      %p56 = scmp.ne.s32.totalorder %s47, %s48
      %p57 = scmp.eq.s32.totalorder %s16, 0
      %p58 = por %p56, %p57
      %p59 = scmp.ne.s32.totalorder %s47, %s48
      %p60 = scmp.eq.s32.totalorder %s17, 1
      %p61 = por %p59, %p60
      %p63 = scmp.ne.s32.totalorder %s48, %s62
      %p64 = scmp.eq.s32.totalorder %s17, 0
      %p65 = por %p63, %p64
      %s67 = sadd.s32 %s66, 1
      %p70 = scmp.eq.s32.totalorder %s11, 1
      %p71 = scmp.ne.s32.totalorder %s66, %s68
      %p72 = scmp.eq.s32.totalorder %s11, 0
      %p73 = por %p71, %p72
      %p74 = scmp.ne.s32.totalorder %s66, %s68
      %p75 = scmp.eq.s32.totalorder %s16, 1
      %p76 = por %p74, %p75
      %p77 = scmp.ne.s32.totalorder %s68, %s69
      %p78 = scmp.eq.s32.totalorder %s16, 0
      %p79 = por %p77, %p78
      %p80 = scmp.ne.s32.totalorder %s68, %s69
      %p81 = scmp.eq.s32.totalorder %s17, 1
      %p82 = por %p80, %p81
      %p84 = scmp.ne.s32.totalorder %s69, %s83
      %p85 = scmp.eq.s32.totalorder %s17, 0
      %p86 = por %p84, %p85
      %s87 = ssub.s32 %s11, %s18
      %p88 = scmp.eq.s32.totalorder %s87, 0
      %s90 = sadd.s32 %s89, 1
      %s91 = scalar_select %p88, %s89, %s90
      %p94 = pneg %p88
      %p95 = scmp.eq.s32.totalorder %s11, 1
      %p96 = por %p94, %p95
      %p97 = scmp.ne.s32.totalorder %s89, %s92
      %p98 = scmp.eq.s32.totalorder %s11, 0
      %p99 = por %p97, %p98
      %p100 = scmp.ne.s32.totalorder %s89, %s92
      %p101 = scmp.eq.s32.totalorder %s16, 1
      %p102 = por %p100, %p101
      %p103 = scmp.ne.s32.totalorder %s92, %s93
      %p104 = scmp.eq.s32.totalorder %s16, 0
      %p105 = por %p103, %p104
      %p106 = scmp.ne.s32.totalorder %s92, %s93
      %p107 = scmp.eq.s32.totalorder %s17, 1
      %p108 = por %p106, %p107
      %p110 = scmp.ne.s32.totalorder %s93, %s109
      %p111 = scmp.eq.s32.totalorder %s17, 0
      %p112 = por %p110, %p111
      %p113 = scmp.le.s32.totalorder 1, %s11
      %p114 = scmp.lt.s32.totalorder %s11, 3
      %p115 = pnand %p113, %p114
      %p116 = pneg %p115
      // Predicated region
      $region9: #{vqvae_jet_forward.1} parent=5 // pred_check
        _
      $region10: #{vqvae_jet_forward.1} parent=5 // pred_check_branch
        %118 = sbr.rel (%p115) target = $region12
      $region11: #{vqvae_jet_forward.1} parent=5 // pred_region
        %s119 = ssub.s32 %s11, 1
        // Predicated region
        $region13: #{vqvae_jet_forward.1} parent=11 // pred_check
          %p120 = pneg %p58
        $region14: #{vqvae_jet_forward.1} parent=11 // pred_check_branch
          %122 = sbr.rel (%p120) target = $region16
        $region15: #{vqvae_jet_forward.1} parent=11 // pred_region
          %s124 = ssub.s32 15232, 15232
          %125 = vsyncadd [#allocation3], %s124
          %s126 = sshll.u32 [#allocation2], 4
          %s127 = int_to_ptr.vmem [resolvable:$true] %s126
          %132 = dma.hbm_to_vmem [thread:$0]  %s1, 15232, %s127, [#allocation3], 128, 128, 8
        $region16: #{vqvae_jet_forward.1} parent=11 // pred_fallthru
          _
        // Predicated region
        $region17: #{vqvae_jet_forward.1} parent=11 // pred_check
          %p133 = pneg %p79
        $region18: #{vqvae_jet_forward.1} parent=11 // pred_check_branch
          %135 = sbr.rel (%p133) target = $region20
        $region19: #{vqvae_jet_forward.1} parent=11 // pred_region
          %s137 = ssub.s32 4352, 4352
          %138 = vsyncadd [#allocation5], %s137
          %s139 = sshll.u32 [#allocation4], 4
          %s140 = int_to_ptr.vmem [resolvable:$true] %s139
          %145 = dma.hbm_to_vmem [thread:$0]  %s2, 4352, %s140, [#allocation5], 256, 256, 16
        $region20: #{vqvae_jet_forward.1} parent=11 // pred_fallthru
          _
      $region12: #{vqvae_jet_forward.1} parent=5 // pred_fallthru
        _
      %p146 = scmp.lt.s32.totalorder %s11, 2
      // Predicated region
      $region21: #{vqvae_jet_forward.1} parent=5 // pred_check
        %p147 = pneg %p146
      $region22: #{vqvae_jet_forward.1} parent=5 // pred_check_branch
        %149 = sbr.rel (%p147) target = $region24
      $region23: #{vqvae_jet_forward.1} parent=5 // pred_region
        // Predicated region
        $region25: #{vqvae_jet_forward.1} parent=23 // pred_check
          %p150 = pneg %p31
        $region26: #{vqvae_jet_forward.1} parent=23 // pred_check_branch
          %152 = sbr.rel (%p150) target = $region28
        $region27: #{vqvae_jet_forward.1} parent=23 // pred_region
          %s153 = smul.u32 16, %s11
          %p154 = scmp.lt.s32.totalorder %s153, 31
          %s155 = scalar_select %p154, %s153, 31
          %s156 = smul.addr %s155, 8
          %s157 = scalar_lea.vmem %s0, %s156
          %s158 = smul.u32 16, %s11
        $region28: #{vqvae_jet_forward.1} parent=23 // pred_fallthru
          _
      $region24: #{vqvae_jet_forward.1} parent=5 // pred_fallthru
        _
      %p159 = scmp.le.s32.totalorder 1, %s11
      %p160 = scmp.lt.s32.totalorder %s11, 3
      %p161 = pnand %p159, %p160
      %p162 = pneg %p161
      // Predicated region
      $region29: #{vqvae_jet_forward.1} parent=5 // pred_check
        _
      $region30: #{vqvae_jet_forward.1} parent=5 // pred_check_branch
        %164 = sbr.rel (%p161) target = $region32
      $region31: #{vqvae_jet_forward.1} parent=5 // pred_region
        %s165 = ssub.s32 %s11, 1
        // Predicated region
        $region33: #{vqvae_jet_forward.1} parent=31 // pred_check
          %p166 = pneg %p58
        $region34: #{vqvae_jet_forward.1} parent=31 // pred_check_branch
          %168 = sbr.rel (%p166) target = $region36
        $region35: #{vqvae_jet_forward.1} parent=31 // pred_region
          %169 = dma.done [#allocation3], 15232
        $region36: #{vqvae_jet_forward.1} parent=31 // pred_fallthru
          _
        // Predicated region
        $region37: #{vqvae_jet_forward.1} parent=31 // pred_check
          %p170 = pneg %p79
        $region38: #{vqvae_jet_forward.1} parent=31 // pred_check_branch
          %172 = sbr.rel (%p170) target = $region40
        $region39: #{vqvae_jet_forward.1} parent=31 // pred_region
          %173 = dma.done [#allocation5], 4352
        $region40: #{vqvae_jet_forward.1} parent=31 // pred_fallthru
          _
        %s174 = smul.u32 16, %s16
        %p175 = scmp.lt.s32.totalorder %s174, 31
        %s176 = scalar_select %p175, %s174, 31
        %s177 = smul.addr %s176, 8
        %s178 = scalar_lea.vmem %s0, %s177
        %p179 = pneg %p37
        %p180 = pneg %p34
        %p181 = pneg %p58
        %p182 = pneg %p55
        %p183 = pneg %p79
        %p184 = pneg %p76
        %p185 = pneg %p105
        %p186 = pneg %p102
        %s187 = smul.u32 16, %s16
        %p188 = scmp.lt.s32.totalorder %s187, 31
        %s189 = scalar_select %p188, %s187, 31
        %s190 = smul.addr %s189, 8
        %s191 = scalar_lea.vmem %s3, %s190
        %s192 = smul.u32 16, %s16
        %p193 = scmp.lt.s32.totalorder %s192, 31
        %s194 = scalar_select %p193, %s192, 31
        %s195 = smul.addr %s194, 8
        %s196 = scalar_lea.vmem %s0, %s195
        %s197 = smul.u32 16, %s16
        %s198 = smul.u32 16, %s16
        %p199 = scmp.lt.s32.totalorder %s198, 31
        %s200 = scalar_select %p199, %s198, 31
        %s201 = smul.addr %s200, 8
        %s202 = scalar_lea.vmem %s3, %s201
        %s203 = smul.u32 16, %s16
        %v204 = vld [vmem:[%s196] sm:$0xff]
        %v205 = vld [vmem:[%s196 + $0x8] sm:$0xff]
        %v206 = vld [vmem:[%s196 + $0x10] sm:$0xff]
        %v207 = vld [vmem:[%s196 + $0x18] sm:$0xff]
        %v208 = vld [vmem:[%s196 + $0x20] sm:$0xff]
        %v209 = vld [vmem:[%s196 + $0x28] sm:$0xff]
        %v210 = vld [vmem:[%s196 + $0x30] sm:$0xff]
        %v211 = vld [vmem:[%s196 + $0x38] sm:$0xff]
        %v212 = vld [vmem:[%s196 + $0x40] sm:$0xff]
        %v213 = vld [vmem:[%s196 + $0x48] sm:$0xff]
        %v214 = vld [vmem:[%s196 + $0x50] sm:$0xff]
        %v215 = vld [vmem:[%s196 + $0x58] sm:$0xff]
        %v216 = vld [vmem:[%s196 + $0x60] sm:$0xff]
        %v217 = vld [vmem:[%s196 + $0x68] sm:$0xff]
        %v218 = vld [vmem:[%s196 + $0x70] sm:$0xff]
        %v219 = vld [vmem:[%s196 + $0x78] sm:$0xff]
        %v220 = vld [vmem:[#allocation2] sm:$0xf]
        %v221 = vld [vmem:[#allocation2 + $0x8] sm:$0x1]
        %v222 = vld [vmem:[#allocation2 + $0x10] sm:$0xff]
        %v223 = vld [vmem:[#allocation2 + $0x18] sm:$0xff]
        %v224 = vld [vmem:[#allocation2 + $0x20] sm:$0xff]
        %v225 = vld [vmem:[#allocation2 + $0x28] sm:$0xff]
        %v226 = vld [vmem:[#allocation2 + $0x30] sm:$0xff]
        %v227 = vld [vmem:[#allocation2 + $0x38] sm:$0xff]
        %v228 = vld [vmem:[#allocation2 + $0x40] sm:$0xff]
        %v229 = vld [vmem:[#allocation2 + $0x48] sm:$0xff]
        %v230 = vld [vmem:[#allocation2 + $0x50] sm:$0xff]
        %v231 = vld [vmem:[#allocation2 + $0x58] sm:$0xff]
        %v232 = vld [vmem:[#allocation2 + $0x60] sm:$0xff]
        %v233 = vld [vmem:[#allocation2 + $0x68] sm:$0xff]
        %v234 = vld [vmem:[#allocation2 + $0x70] sm:$0xff]
        %v235 = vld [vmem:[#allocation2 + $0x78] sm:$0xff]
        %v236 = vld [vmem:[#allocation2 + $0x80] sm:$0xff]
        %v237 = vld [vmem:[#allocation2 + $0x88] sm:$0xff]
        %v238 = vld [vmem:[#allocation2 + $0x90] sm:$0x1]
        %v239 = vld [vmem:[#allocation2 + $0x98] sm:$0xff]
        %v240 = vld [vmem:[#allocation2 + $0xa0] sm:$0xff]
        %v241 = vld [vmem:[#allocation2 + $0xa8] sm:$0xff]
        %v242 = vld [vmem:[#allocation2 + $0xb0] sm:$0xff]
        %v243 = vld [vmem:[#allocation2 + $0xb8] sm:$0xff]
        %v244 = vld [vmem:[#allocation2 + $0xc0] sm:$0xff]
        %v245 = vld [vmem:[#allocation2 + $0xc8] sm:$0xff]
        %v246 = vld [vmem:[#allocation2 + $0xd0] sm:$0xff]
        %v247 = vld [vmem:[#allocation2 + $0xd8] sm:$0xff]
        %v248 = vld [vmem:[#allocation2 + $0xe0] sm:$0xff]
        %v249 = vld [vmem:[#allocation2 + $0xe8] sm:$0xff]
        %v250 = vld [vmem:[#allocation2 + $0xf0] sm:$0xff]
        %v251 = vld [vmem:[#allocation2 + $0xf8] sm:$0xff]
        %v252 = vld [vmem:[#allocation2 + $0x100] sm:$0xff]
        %v253 = vld [vmem:[#allocation2 + $0x108] sm:$0xff]
        %v254 = vld [vmem:[#allocation2 + $0x110] sm:$0xff]
        %v255 = vld [vmem:[#allocation2 + $0x118] sm:$0x1]
        %v256 = vld [vmem:[#allocation2 + $0x120] sm:$0xff]
        %v257 = vld [vmem:[#allocation2 + $0x128] sm:$0xff]
        %v258 = vld [vmem:[#allocation2 + $0x130] sm:$0xff]
        %v259 = vld [vmem:[#allocation2 + $0x138] sm:$0xff]
        %v260 = vld [vmem:[#allocation2 + $0x140] sm:$0xff]
        %v261 = vld [vmem:[#allocation2 + $0x148] sm:$0xff]
        %v262 = vld [vmem:[#allocation2 + $0x150] sm:$0xff]
        %v263 = vld [vmem:[#allocation2 + $0x158] sm:$0xff]
        %v264 = vld [vmem:[#allocation2 + $0x160] sm:$0xff]
        %v265 = vld [vmem:[#allocation2 + $0x168] sm:$0xff]
        %v266 = vld [vmem:[#allocation2 + $0x170] sm:$0xff]
        %v267 = vld [vmem:[#allocation2 + $0x178] sm:$0xff]
        %v268 = vld [vmem:[#allocation2 + $0x180] sm:$0xff]
        %v269 = vld [vmem:[#allocation2 + $0x188] sm:$0xff]
        %v270 = vld [vmem:[#allocation2 + $0x190] sm:$0xff]
        %v271 = vld [vmem:[#allocation2 + $0x198] sm:$0xff]
        %v272 = vld [vmem:[#allocation2 + $0x1a0] sm:$0x1]
        %v273 = vld [vmem:[#allocation2 + $0x1a8] sm:$0xff]
        %v274 = vld [vmem:[#allocation2 + $0x1b0] sm:$0xff]
        %v275 = vld [vmem:[#allocation2 + $0x1b8] sm:$0xff]
        %v276 = vld [vmem:[#allocation2 + $0x1c0] sm:$0xff]
        %v277 = vld [vmem:[#allocation2 + $0x1c8] sm:$0xff]
        %v278 = vld [vmem:[#allocation2 + $0x1d0] sm:$0xff]
        %v279 = vld [vmem:[#allocation2 + $0x1d8] sm:$0xff]
        %v280 = vld [vmem:[#allocation2 + $0x1e0] sm:$0xff]
        %v281 = vld [vmem:[#allocation2 + $0x1e8] sm:$0xff]
        %v282 = vld [vmem:[#allocation2 + $0x1f0] sm:$0xff]
        %v283 = vld [vmem:[#allocation2 + $0x1f8] sm:$0xff]
        %v284 = vld [vmem:[#allocation2 + $0x200] sm:$0xff]
        %v285 = vld [vmem:[#allocation2 + $0x208] sm:$0xff]
        %v286 = vld [vmem:[#allocation2 + $0x210] sm:$0xff]
        %v287 = vld [vmem:[#allocation2 + $0x218] sm:$0xff]
        %v288 = vld [vmem:[#allocation2 + $0x220] sm:$0xff]
        %v289 = vld [vmem:[#allocation2 + $0x228] sm:$0x1]
        %v290 = vld [vmem:[#allocation2 + $0x230] sm:$0xff]
        %v291 = vld [vmem:[#allocation2 + $0x238] sm:$0xff]
        %v292 = vld [vmem:[#allocation2 + $0x240] sm:$0xff]
        %v293 = vld [vmem:[#allocation2 + $0x248] sm:$0xff]
        %v294 = vld [vmem:[#allocation2 + $0x250] sm:$0xff]
        %v295 = vld [vmem:[#allocation2 + $0x258] sm:$0xff]
        %v296 = vld [vmem:[#allocation2 + $0x260] sm:$0xff]
        %v297 = vld [vmem:[#allocation2 + $0x268] sm:$0xff]
        %v298 = vld [vmem:[#allocation2 + $0x270] sm:$0xff]
        %v299 = vld [vmem:[#allocation2 + $0x278] sm:$0xff]
        %v300 = vld [vmem:[#allocation2 + $0x280] sm:$0xff]
        %v301 = vld [vmem:[#allocation2 + $0x288] sm:$0xff]
        %v302 = vld [vmem:[#allocation2 + $0x290] sm:$0xff]
        %v303 = vld [vmem:[#allocation2 + $0x298] sm:$0xff]
        %v304 = vld [vmem:[#allocation2 + $0x2a0] sm:$0xff]
        %v305 = vld [vmem:[#allocation2 + $0x2a8] sm:$0xff]
        %v306 = vld [vmem:[#allocation2 + $0x2b0] sm:$0x1]
        %v307 = vld [vmem:[#allocation2 + $0x2b8] sm:$0xff]
        %v308 = vld [vmem:[#allocation2 + $0x2c0] sm:$0xff]
        %v309 = vld [vmem:[#allocation2 + $0x2c8] sm:$0xff]
        %v310 = vld [vmem:[#allocation2 + $0x2d0] sm:$0xff]
        %v311 = vld [vmem:[#allocation2 + $0x2d8] sm:$0xff]
        %v312 = vld [vmem:[#allocation2 + $0x2e0] sm:$0xff]
        %v313 = vld [vmem:[#allocation2 + $0x2e8] sm:$0xff]
        %v314 = vld [vmem:[#allocation2 + $0x2f0] sm:$0xff]
        %v315 = vld [vmem:[#allocation2 + $0x2f8] sm:$0xff]
        %v316 = vld [vmem:[#allocation2 + $0x300] sm:$0xff]
        %v317 = vld [vmem:[#allocation2 + $0x308] sm:$0xff]
        %v318 = vld [vmem:[#allocation2 + $0x310] sm:$0xff]
        %v319 = vld [vmem:[#allocation2 + $0x318] sm:$0xff]
        %v320 = vld [vmem:[#allocation2 + $0x320] sm:$0xff]
        %v321 = vld [vmem:[#allocation2 + $0x328] sm:$0xff]
        %v322 = vld [vmem:[#allocation2 + $0x330] sm:$0xff]
        %v323 = vld [vmem:[#allocation2 + $0x338] sm:$0xff]
        %v324 = vld [vmem:[#allocation2 + $0x340] sm:$0xff]
        %v325 = vld [vmem:[#allocation2 + $0x348] sm:$0xff]
        %v326 = vld [vmem:[#allocation2 + $0x350] sm:$0xff]
        %v327 = vld [vmem:[#allocation2 + $0x358] sm:$0xff]
        %v328 = vld [vmem:[#allocation2 + $0x360] sm:$0xff]
        %v329 = vld [vmem:[#allocation2 + $0x368] sm:$0xff]
        %v330 = vld [vmem:[#allocation2 + $0x370] sm:$0xff]
        %v331 = vld [vmem:[#allocation2 + $0x378] sm:$0xff]
        %v332 = vld [vmem:[#allocation2 + $0x380] sm:$0xff]
        %v333 = vld [vmem:[#allocation2 + $0x388] sm:$0xff]
        %v334 = vld [vmem:[#allocation2 + $0x390] sm:$0xff]
        %v335 = vld [vmem:[#allocation2 + $0x398] sm:$0xff]
        %v336 = vld [vmem:[#allocation2 + $0x3a0] sm:$0xff]
        %v337 = vld [vmem:[#allocation2 + $0x3a8] sm:$0xff]
        %v338 = vld [vmem:[#allocation2 + $0x3b0] sm:$0xff]
        %v339 = vld [vmem:[#allocation4] sm:$0xff]
        %v340 = vld [vmem:[#allocation4 + $0x8] sm:$0xff]
        %v341 = vld [vmem:[#allocation4 + $0x10] sm:$0xff]
        %v342 = vld [vmem:[#allocation4 + $0x18] sm:$0xff]
        %v343 = vld [vmem:[#allocation4 + $0x20] sm:$0xff]
        %v344 = vld [vmem:[#allocation4 + $0x28] sm:$0xff]
        %v345 = vld [vmem:[#allocation4 + $0x30] sm:$0xff]
        %v346 = vld [vmem:[#allocation4 + $0x38] sm:$0xff]
        %v347 = vld [vmem:[#allocation4 + $0x40] sm:$0xff]
        %v348 = vld [vmem:[#allocation4 + $0x48] sm:$0xff]
        %v349 = vld [vmem:[#allocation4 + $0x50] sm:$0xff]
        %v350 = vld [vmem:[#allocation4 + $0x58] sm:$0xff]
        %v351 = vld [vmem:[#allocation4 + $0x60] sm:$0xff]
        %v352 = vld [vmem:[#allocation4 + $0x68] sm:$0xff]
        %v353 = vld [vmem:[#allocation4 + $0x70] sm:$0xff]
        %v354 = vld [vmem:[#allocation4 + $0x78] sm:$0xff]
        %v355 = vld [vmem:[#allocation4 + $0x80] sm:$0xff]
        %v356 = vld [vmem:[#allocation4 + $0x88] sm:$0xff]
        %v357 = vld [vmem:[#allocation4 + $0x90] sm:$0xff]
        %v358 = vld [vmem:[#allocation4 + $0x98] sm:$0xff]
        %v359 = vld [vmem:[#allocation4 + $0xa0] sm:$0xff]
        %v360 = vld [vmem:[#allocation4 + $0xa8] sm:$0xff]
        %v361 = vld [vmem:[#allocation4 + $0xb0] sm:$0xff]
        %v362 = vld [vmem:[#allocation4 + $0xb8] sm:$0xff]
        %v363 = vld [vmem:[#allocation4 + $0xc0] sm:$0xff]
        %v364 = vld [vmem:[#allocation4 + $0xc8] sm:$0xff]
        %v365 = vld [vmem:[#allocation4 + $0xd0] sm:$0xff]
        %v366 = vld [vmem:[#allocation4 + $0xd8] sm:$0xff]
        %v367 = vld [vmem:[#allocation4 + $0xe0] sm:$0xff]
        %v368 = vld [vmem:[#allocation4 + $0xe8] sm:$0xff]
        %v369 = vld [vmem:[#allocation4 + $0xf0] sm:$0xff]
        %v370 = vld [vmem:[#allocation4 + $0xf8] sm:$0xff]
        %s371 = scalar_lea.vmem [#allocation4], 256
        %v372 = vld [vmem:[%s371] ss:$8 sm:$0x3]
        %v373 = vlaneseq
        %v374 = vshrl.u32 %v373, 7
        %v375 = vsub.s32 0, %v374
        %v376 = vrot.slane %v221, %v375
        %vm377 = vcmask 31744
        %v379 = vsel %vm377, %v204, 0
        %v382 = vsel %vm377, %v205, 0
        %v385 = vsel %vm377, %v206, 0
        %v388 = vsel %vm377, %v207, 0
        %v391 = vsel %vm377, %v208, 0
        %v394 = vsel %vm377, %v209, 0
        %v397 = vsel %vm377, %v210, 0
        %v400 = vsel %vm377, %v211, 0
        %v403 = vsel %vm377, %v212, 0
        %v406 = vsel %vm377, %v213, 0
        %v409 = vsel %vm377, %v214, 0
        %v412 = vsel %vm377, %v215, 0
        %v415 = vsel %vm377, %v216, 0
        %v418 = vsel %vm377, %v217, 0
        %v421 = vsel %vm377, %v218, 0
        %v424 = vsel %vm377, %v219, 0
        %vm426 = vcmask 1043456
        %v428 = vsel %vm426, %v220, 0
        %430 = vmatprep.subr.mxu0 0.0
        %431 = vmatpush1.msra.mxu0 %v428
        %432 = vmatprep.subr.mxu0 0.0
        %433 = vmatpush1.msra.mxu0 0.0
        %434 = vmatprep.subr.mxu0 0.0
        %435 = vmatpush1.msra.mxu0 0.0
        %436 = vmatprep.subr.mxu0 0.0
        %437 = vmatpush1.msra.mxu0 0.0
        %438 = vmatprep.subr.mxu0 0.0
        %439 = vmatpush1.msra.mxu0 0.0
        %440 = vmatprep.subr.mxu0 0.0
        %441 = vmatpush1.msra.mxu0 0.0
        %442 = vmatprep.subr.mxu0 0.0
        %443 = vmatpush1.msra.mxu0 0.0
        %444 = vmatprep.subr.mxu0 0.0
        %445 = vmatpush1.msra.mxu0 0.0
        %446 = vmatprep.subr.mxu0 0.0
        %447 = vmatpush1.msra.mxu0 0.0
        %448 = vmatprep.subr.mxu0 0.0
        %449 = vmatpush1.msra.mxu0 0.0
        %450 = vmatprep.subr.mxu0 0.0
        %451 = vmatpush1.msra.mxu0 0.0
        %452 = vmatprep.subr.mxu0 0.0
        %453 = vmatpush1.msra.mxu0 0.0
        %454 = vmatprep.subr.mxu0 0.0
        %455 = vmatpush1.msra.mxu0 0.0
        %456 = vmatprep.subr.mxu0 0.0
        %457 = vmatpush1.msra.mxu0 0.0
        %458 = vmatprep.subr.mxu0 0.0
        %459 = vmatpush1.msra.mxu0 0.0
        %460 = vmatprep.subr.mxu0 0.0
        %461 = vmatpush1.msra.mxu0 0.0
        %462 = vmatprep.subr.mxu0 0.0
        %463 = vmatpush1.msra.mxu0 0.0
        %464 = vmatprep.subr.mxu0 0.0
        %465 = vmatpush1.msra.mxu0 0.0
        %466 = vmatprep.subr.mxu0 0.0
        %467 = vmatpush1.msra.mxu0 0.0
        %468 = vmatprep.subr.mxu0 0.0
        %469 = vmatpush1.msra.mxu0 0.0
        %470 = vmatprep.subr.mxu0 0.0
        %471 = vmatpush1.msra.mxu0 0.0
        %472 = vmatprep.subr.mxu0 0.0
        %473 = vmatpush1.msra.mxu0 0.0
        %474 = vmatprep.subr.mxu0 0.0
        %475 = vmatpush1.msra.mxu0 0.0
        %476 = vmatprep.subr.mxu0 0.0
        %477 = vmatpush1.msra.mxu0 0.0
        %478 = vmatprep.subr.mxu0 0.0
        %479 = vmatpush1.msra.mxu0 0.0
        %480 = vmatprep.subr.mxu0 0.0
        %481 = vmatpush1.msra.mxu0 0.0
        %482 = vmatprep.subr.mxu0 0.0
        %483 = vmatpush1.msra.mxu0 0.0
        %484 = vmatprep.subr.mxu0 0.0
        %485 = vmatpush1.msra.mxu0 0.0
        %486 = vmatprep.subr.mxu0 0.0
        %487 = vmatpush1.msra.mxu0 0.0
        %488 = vmatprep.subr.mxu0 0.0
        %489 = vmatpush1.msra.mxu0 0.0
        %490 = vmatprep.subr.mxu0 0.0
        %491 = vmatpush1.msra.mxu0 0.0
        %492 = vmatprep.subr.mxu0 0.0
        %493 = vmatpush1.msra.mxu0 0.0
        %494 = vmatprep.mubr.f32.mxu0 0.0
        %495 = vmatmul.mubr.f32.gmra.mrb[0].mxu0 %v379
        %v496 = vpop.f32.mrb[0].mxu0
        %v497 = vadd.f32 %v376, %v496
        %v498 = vpop.f32.mrb[0].mxu0
        %499 = vmatprep.mubr.f32.mxu0 0.0
        %500 = vmatmul.mubr.f32.gmra.mrb[0].mxu0 %v382
        %v501 = vpop.f32.mrb[0].mxu0
        %v502 = vadd.f32 %v376, %v501
        %v503 = vpop.f32.mrb[0].mxu0
        %504 = vmatprep.mubr.f32.mxu0 0.0
        %505 = vmatmul.mubr.f32.gmra.mrb[0].mxu0 %v385
        %v506 = vpop.f32.mrb[0].mxu0
        %v507 = vadd.f32 %v376, %v506
        %v508 = vpop.f32.mrb[0].mxu0
        %509 = vmatprep.mubr.f32.mxu0 0.0
        %510 = vmatmul.mubr.f32.gmra.mrb[0].mxu0 %v388
        %v511 = vpop.f32.mrb[0].mxu0
        %v512 = vadd.f32 %v376, %v511
        %v513 = vpop.f32.mrb[0].mxu0
        %514 = vmatprep.mubr.f32.mxu0 0.0
        %515 = vmatmul.mubr.f32.gmra.mrb[0].mxu0 %v391
        %v516 = vpop.f32.mrb[0].mxu0
        %v517 = vadd.f32 %v376, %v516
        %v518 = vpop.f32.mrb[0].mxu0
        %519 = vmatprep.mubr.f32.mxu0 0.0
        %520 = vmatmul.mubr.f32.gmra.mrb[0].mxu0 %v394
        %v521 = vpop.f32.mrb[0].mxu0
        %v522 = vadd.f32 %v376, %v521
        %v523 = vpop.f32.mrb[0].mxu0
        %524 = vmatprep.mubr.f32.mxu0 0.0
        %525 = vmatmul.mubr.f32.gmra.mrb[0].mxu0 %v397
        %v526 = vpop.f32.mrb[0].mxu0
        %v527 = vadd.f32 %v376, %v526
        %v528 = vpop.f32.mrb[0].mxu0
        %529 = vmatprep.mubr.f32.mxu0 0.0
        %530 = vmatmul.mubr.f32.gmra.mrb[0].mxu0 %v400
        %v531 = vpop.f32.mrb[0].mxu0
        %v532 = vadd.f32 %v376, %v531
        %v533 = vpop.f32.mrb[0].mxu0
        %534 = vmatprep.mubr.f32.mxu0 0.0
        %535 = vmatmul.mubr.f32.gmra.mrb[0].mxu0 %v403
        %v536 = vpop.f32.mrb[0].mxu0
        %v537 = vadd.f32 %v376, %v536
        %v538 = vpop.f32.mrb[0].mxu0
        %539 = vmatprep.mubr.f32.mxu0 0.0
        %540 = vmatmul.mubr.f32.gmra.mrb[0].mxu0 %v406
        %v541 = vpop.f32.mrb[0].mxu0
        %v542 = vadd.f32 %v376, %v541
        %v543 = vpop.f32.mrb[0].mxu0
        %544 = vmatprep.mubr.f32.mxu0 0.0
        %545 = vmatmul.mubr.f32.gmra.mrb[0].mxu0 %v409
        %v546 = vpop.f32.mrb[0].mxu0
        %v547 = vadd.f32 %v376, %v546
        %v548 = vpop.f32.mrb[0].mxu0
        %549 = vmatprep.mubr.f32.mxu0 0.0
        %550 = vmatmul.mubr.f32.gmra.mrb[0].mxu0 %v412
        %v551 = vpop.f32.mrb[0].mxu0
        %v552 = vadd.f32 %v376, %v551
        %v553 = vpop.f32.mrb[0].mxu0
        %554 = vmatprep.mubr.f32.mxu0 0.0
        %555 = vmatmul.mubr.f32.gmra.mrb[0].mxu0 %v415
        %v556 = vpop.f32.mrb[0].mxu0
        %v557 = vadd.f32 %v376, %v556
        %v558 = vpop.f32.mrb[0].mxu0
        %559 = vmatprep.mubr.f32.mxu0 0.0
        %560 = vmatmul.mubr.f32.gmra.mrb[0].mxu0 %v418
        %v561 = vpop.f32.mrb[0].mxu0
        %v562 = vadd.f32 %v376, %v561
        %v563 = vpop.f32.mrb[0].mxu0
        %564 = vmatprep.mubr.f32.mxu0 0.0
        %565 = vmatmul.mubr.f32.gmra.mrb[0].mxu0 %v421
        %v566 = vpop.f32.mrb[0].mxu0
        %v567 = vadd.f32 %v376, %v566
        %v568 = vpop.f32.mrb[0].mxu0
        %569 = vmatprep.mubr.f32.mxu0 0.0
        %570 = vmatmul.mubr.f32.gmra.mrb[0].mxu0 %v424
        %v571 = vpop.f32.mrb[0].mxu0
        %v572 = vadd.f32 %v376, %v571
        %v573 = vpop.f32.mrb[0].mxu0
        %574 = vdwg.mxu0
        %v575 = vmul.f32 %v497, 0.5
        %v576 = vmul.f32 %v502, 0.5
        %v577 = vmul.f32 %v507, 0.5
        %v578 = vmul.f32 %v512, 0.5
        %v579 = vmul.f32 %v517, 0.5
        %v580 = vmul.f32 %v522, 0.5
        %v581 = vmul.f32 %v527, 0.5
        %v582 = vmul.f32 %v532, 0.5
        %v583 = vmul.f32 %v537, 0.5
        %v584 = vmul.f32 %v542, 0.5
        %v585 = vmul.f32 %v547, 0.5
        %v586 = vmul.f32 %v552, 0.5
        %v587 = vmul.f32 %v557, 0.5
        %v588 = vmul.f32 %v562, 0.5
        %v589 = vmul.f32 %v567, 0.5
        %v590 = vmul.f32 %v572, 0.5
        %v591 = vmul.f32 %v497, 0.70710677
        %v592 = vmul.f32 %v502, 0.70710677
        %v593 = vmul.f32 %v507, 0.70710677
        %v594 = vmul.f32 %v512, 0.70710677
        %v595 = vmul.f32 %v517, 0.70710677
        %v596 = vmul.f32 %v522, 0.70710677
        %v597 = vmul.f32 %v527, 0.70710677
        %v598 = vmul.f32 %v532, 0.70710677
        %v599 = vmul.f32 %v537, 0.70710677
        %v600 = vmul.f32 %v542, 0.70710677
        %v601 = vmul.f32 %v547, 0.70710677
        %v602 = vmul.f32 %v552, 0.70710677
        %v603 = vmul.f32 %v557, 0.70710677
        %v604 = vmul.f32 %v562, 0.70710677
        %v605 = vmul.f32 %v567, 0.70710677
        %v606 = vmul.f32 %v572, 0.70710677
        %v607 = verf.f32.pop %v591
        %v608 = verf.f32.pop %v592
        %v609 = verf.f32.pop %v593
        %v610 = verf.f32.pop %v594
        %v611 = verf.f32.pop %v595
        %v612 = verf.f32.pop %v596
        %v613 = verf.f32.pop %v597
        %v614 = verf.f32.pop %v598
        %v615 = verf.f32.pop %v599
        %v616 = verf.f32.pop %v600
        %v617 = verf.f32.pop %v601
        %v618 = verf.f32.pop %v602
        %v619 = verf.f32.pop %v603
        %v620 = verf.f32.pop %v604
        %v621 = verf.f32.pop %v605
        %v622 = verf.f32.pop %v606
        %v623 = vadd.f32 %v607, 1.0
        %v624 = vadd.f32 %v608, 1.0
        %v625 = vadd.f32 %v609, 1.0
        %v626 = vadd.f32 %v610, 1.0
        %v627 = vadd.f32 %v611, 1.0
        %v628 = vadd.f32 %v612, 1.0
        %v629 = vadd.f32 %v613, 1.0
        %v630 = vadd.f32 %v614, 1.0
        %v631 = vadd.f32 %v615, 1.0
        %v632 = vadd.f32 %v616, 1.0
        %v633 = vadd.f32 %v617, 1.0
        %v634 = vadd.f32 %v618, 1.0
        %v635 = vadd.f32 %v619, 1.0
        %v636 = vadd.f32 %v620, 1.0
        %v637 = vadd.f32 %v621, 1.0
        %v638 = vadd.f32 %v622, 1.0
        %v639 = vmul.f32 %v575, %v623
        %v640 = vmul.f32 %v576, %v624
        %v641 = vmul.f32 %v577, %v625
        %v642 = vmul.f32 %v578, %v626
        %v643 = vmul.f32 %v579, %v627
        %v644 = vmul.f32 %v580, %v628
        %v645 = vmul.f32 %v581, %v629
        %v646 = vmul.f32 %v582, %v630
        %v647 = vmul.f32 %v583, %v631
        %v648 = vmul.f32 %v584, %v632
        %v649 = vmul.f32 %v585, %v633
        %v650 = vmul.f32 %v586, %v634
        %v651 = vmul.f32 %v587, %v635
        %v652 = vmul.f32 %v588, %v636
        %v653 = vmul.f32 %v589, %v637
        %v654 = vmul.f32 %v590, %v638
        %v655 = vlaneseq
        %v656 = vshrl.u32 %v655, 7
        %v657 = vsub.s32 0, %v656
        %v658 = vrot.slane %v238, %v657
        %659 = vmatprep.subr.mxu0 0.0
        %660 = vmatpush1.msra.mxu0 %v222
        %661 = vmatprep.subr.mxu0 0.0
        %662 = vmatpush1.msra.mxu0 %v223
        %663 = vmatprep.subr.mxu0 0.0
        %664 = vmatpush1.msra.mxu0 %v224
        %665 = vmatprep.subr.mxu0 0.0
        %666 = vmatpush1.msra.mxu0 %v225
        %667 = vmatprep.subr.mxu0 0.0
        %668 = vmatpush1.msra.mxu0 %v226
        %669 = vmatprep.subr.mxu0 0.0
        %670 = vmatpush1.msra.mxu0 %v227
        %671 = vmatprep.subr.mxu0 0.0
        %672 = vmatpush1.msra.mxu0 %v228
        %673 = vmatprep.subr.mxu0 0.0
        %674 = vmatpush1.msra.mxu0 %v229
        %675 = vmatprep.subr.mxu0 0.0
        %676 = vmatpush1.msra.mxu0 %v230
        %677 = vmatprep.subr.mxu0 0.0
        %678 = vmatpush1.msra.mxu0 %v231
        %679 = vmatprep.subr.mxu0 0.0
        %680 = vmatpush1.msra.mxu0 %v232
        %681 = vmatprep.subr.mxu0 0.0
        %682 = vmatpush1.msra.mxu0 %v233
        %683 = vmatprep.subr.mxu0 0.0
        %684 = vmatpush1.msra.mxu0 %v234
        %685 = vmatprep.subr.mxu0 0.0
        %686 = vmatpush1.msra.mxu0 %v235
        %687 = vmatprep.subr.mxu0 0.0
        %688 = vmatpush1.msra.mxu0 %v236
        %689 = vmatprep.subr.mxu0 0.0
        %690 = vmatpush1.msra.mxu0 %v237
        %691 = vmatprep.subr.mxu0 0.0
        %692 = vmatpush1.msra.mxu0 0.0
        %693 = vmatprep.subr.mxu0 0.0
        %694 = vmatpush1.msra.mxu0 0.0
        %695 = vmatprep.subr.mxu0 0.0
        %696 = vmatpush1.msra.mxu0 0.0
        %697 = vmatprep.subr.mxu0 0.0
        %698 = vmatpush1.msra.mxu0 0.0
        %699 = vmatprep.subr.mxu0 0.0
        %700 = vmatpush1.msra.mxu0 0.0
        %701 = vmatprep.subr.mxu0 0.0
        %702 = vmatpush1.msra.mxu0 0.0
        %703 = vmatprep.subr.mxu0 0.0
        %704 = vmatpush1.msra.mxu0 0.0
        %705 = vmatprep.subr.mxu0 0.0
        %706 = vmatpush1.msra.mxu0 0.0
        %707 = vmatprep.subr.mxu0 0.0
        %708 = vmatpush1.msra.mxu0 0.0
        %709 = vmatprep.subr.mxu0 0.0
        %710 = vmatpush1.msra.mxu0 0.0
        %711 = vmatprep.subr.mxu0 0.0
        %712 = vmatpush1.msra.mxu0 0.0
        %713 = vmatprep.subr.mxu0 0.0
        %714 = vmatpush1.msra.mxu0 0.0
        %715 = vmatprep.subr.mxu0 0.0
        %716 = vmatpush1.msra.mxu0 0.0
        %717 = vmatprep.subr.mxu0 0.0
        %718 = vmatpush1.msra.mxu0 0.0
        %719 = vmatprep.subr.mxu0 0.0
        %720 = vmatpush1.msra.mxu0 0.0
        %721 = vmatprep.subr.mxu0 0.0
        %722 = vmatpush1.msra.mxu0 0.0
        %723 = vmatprep.mubr.f32.mxu0 0.0
        %724 = vmatmul.mubr.f32.gmra.mrb[0].mxu0 %v639
        %v725 = vpop.f32.mrb[0].mxu0
        %v726 = vadd.f32 %v658, %v725
        %v727 = vpop.f32.mrb[0].mxu0
        %728 = vmatprep.mubr.f32.mxu0 0.0
        %729 = vmatmul.mubr.f32.gmra.mrb[0].mxu0 %v640
        %v730 = vpop.f32.mrb[0].mxu0
        %v731 = vadd.f32 %v658, %v730
        %v732 = vpop.f32.mrb[0].mxu0
        %733 = vmatprep.mubr.f32.mxu0 0.0
        %734 = vmatmul.mubr.f32.gmra.mrb[0].mxu0 %v641
        %v735 = vpop.f32.mrb[0].mxu0
        %v736 = vadd.f32 %v658, %v735
        %v737 = vpop.f32.mrb[0].mxu0
        %738 = vmatprep.mubr.f32.mxu0 0.0
        %739 = vmatmul.mubr.f32.gmra.mrb[0].mxu0 %v642
        %v740 = vpop.f32.mrb[0].mxu0
        %v741 = vadd.f32 %v658, %v740
        %v742 = vpop.f32.mrb[0].mxu0
        %743 = vmatprep.mubr.f32.mxu0 0.0
        %744 = vmatmul.mubr.f32.gmra.mrb[0].mxu0 %v643
        %v745 = vpop.f32.mrb[0].mxu0
        %v746 = vadd.f32 %v658, %v745
        %v747 = vpop.f32.mrb[0].mxu0
        %748 = vmatprep.mubr.f32.mxu0 0.0
        %749 = vmatmul.mubr.f32.gmra.mrb[0].mxu0 %v644
        %v750 = vpop.f32.mrb[0].mxu0
        %v751 = vadd.f32 %v658, %v750
        %v752 = vpop.f32.mrb[0].mxu0
        %753 = vmatprep.mubr.f32.mxu0 0.0
        %754 = vmatmul.mubr.f32.gmra.mrb[0].mxu0 %v645
        %v755 = vpop.f32.mrb[0].mxu0
        %v756 = vadd.f32 %v658, %v755
        %v757 = vpop.f32.mrb[0].mxu0
        %758 = vmatprep.mubr.f32.mxu0 0.0
        %759 = vmatmul.mubr.f32.gmra.mrb[0].mxu0 %v646
        %v760 = vpop.f32.mrb[0].mxu0
        %v761 = vadd.f32 %v658, %v760
        %v762 = vpop.f32.mrb[0].mxu0
        %763 = vmatprep.mubr.f32.mxu0 0.0
        %764 = vmatmul.mubr.f32.gmra.mrb[0].mxu0 %v647
        %v765 = vpop.f32.mrb[0].mxu0
        %v766 = vadd.f32 %v658, %v765
        %v767 = vpop.f32.mrb[0].mxu0
        %768 = vmatprep.mubr.f32.mxu0 0.0
        %769 = vmatmul.mubr.f32.gmra.mrb[0].mxu0 %v648
        %v770 = vpop.f32.mrb[0].mxu0
        %v771 = vadd.f32 %v658, %v770
        %v772 = vpop.f32.mrb[0].mxu0
        %773 = vmatprep.mubr.f32.mxu0 0.0
        %774 = vmatmul.mubr.f32.gmra.mrb[0].mxu0 %v649
        %v775 = vpop.f32.mrb[0].mxu0
        %v776 = vadd.f32 %v658, %v775
        %v777 = vpop.f32.mrb[0].mxu0
        %778 = vmatprep.mubr.f32.mxu0 0.0
        %779 = vmatmul.mubr.f32.gmra.mrb[0].mxu0 %v650
        %v780 = vpop.f32.mrb[0].mxu0
        %v781 = vadd.f32 %v658, %v780
        %v782 = vpop.f32.mrb[0].mxu0
        %783 = vmatprep.mubr.f32.mxu0 0.0
        %784 = vmatmul.mubr.f32.gmra.mrb[0].mxu0 %v651
        %v785 = vpop.f32.mrb[0].mxu0
        %v786 = vadd.f32 %v658, %v785
        %v787 = vpop.f32.mrb[0].mxu0
        %788 = vmatprep.mubr.f32.mxu0 0.0
        %789 = vmatmul.mubr.f32.gmra.mrb[0].mxu0 %v652
        %v790 = vpop.f32.mrb[0].mxu0
        %v791 = vadd.f32 %v658, %v790
        %v792 = vpop.f32.mrb[0].mxu0
        %793 = vmatprep.mubr.f32.mxu0 0.0
        %794 = vmatmul.mubr.f32.gmra.mrb[0].mxu0 %v653
        %v795 = vpop.f32.mrb[0].mxu0
        %v796 = vadd.f32 %v658, %v795
        %v797 = vpop.f32.mrb[0].mxu0
        %798 = vmatprep.mubr.f32.mxu0 0.0
        %799 = vmatmul.mubr.f32.gmra.mrb[0].mxu0 %v654
        %v800 = vpop.f32.mrb[0].mxu0
        %v801 = vadd.f32 %v658, %v800
        %v802 = vpop.f32.mrb[0].mxu0
        %803 = vdwg.mxu0
        %v804 = vmul.f32 %v726, 0.5
        %v805 = vmul.f32 %v731, 0.5
        %v806 = vmul.f32 %v736, 0.5
        %v807 = vmul.f32 %v741, 0.5
        %v808 = vmul.f32 %v746, 0.5
        %v809 = vmul.f32 %v751, 0.5
        %v810 = vmul.f32 %v756, 0.5
        %v811 = vmul.f32 %v761, 0.5
        %v812 = vmul.f32 %v766, 0.5
        %v813 = vmul.f32 %v771, 0.5
        %v814 = vmul.f32 %v776, 0.5
        %v815 = vmul.f32 %v781, 0.5
        %v816 = vmul.f32 %v786, 0.5
        %v817 = vmul.f32 %v791, 0.5
        %v818 = vmul.f32 %v796, 0.5
        %v819 = vmul.f32 %v801, 0.5
        %v820 = vmul.f32 %v726, 0.70710677
        %v821 = vmul.f32 %v731, 0.70710677
        %v822 = vmul.f32 %v736, 0.70710677
        %v823 = vmul.f32 %v741, 0.70710677
        %v824 = vmul.f32 %v746, 0.70710677
        %v825 = vmul.f32 %v751, 0.70710677
        %v826 = vmul.f32 %v756, 0.70710677
        %v827 = vmul.f32 %v761, 0.70710677
        %v828 = vmul.f32 %v766, 0.70710677
        %v829 = vmul.f32 %v771, 0.70710677
        %v830 = vmul.f32 %v776, 0.70710677
        %v831 = vmul.f32 %v781, 0.70710677
        %v832 = vmul.f32 %v786, 0.70710677
        %v833 = vmul.f32 %v791, 0.70710677
        %v834 = vmul.f32 %v796, 0.70710677
        %v835 = vmul.f32 %v801, 0.70710677
        %v836 = verf.f32.pop %v820
        %v837 = verf.f32.pop %v821
        %v838 = verf.f32.pop %v822
        %v839 = verf.f32.pop %v823
        %v840 = verf.f32.pop %v824
        %v841 = verf.f32.pop %v825
        %v842 = verf.f32.pop %v826
        %v843 = verf.f32.pop %v827
        %v844 = verf.f32.pop %v828
        %v845 = verf.f32.pop %v829
        %v846 = verf.f32.pop %v830
        %v847 = verf.f32.pop %v831
        %v848 = verf.f32.pop %v832
        %v849 = verf.f32.pop %v833
        %v850 = verf.f32.pop %v834
        %v851 = verf.f32.pop %v835
        %v852 = vadd.f32 %v836, 1.0
        %v853 = vadd.f32 %v837, 1.0
        %v854 = vadd.f32 %v838, 1.0
        %v855 = vadd.f32 %v839, 1.0
        %v856 = vadd.f32 %v840, 1.0
        %v857 = vadd.f32 %v841, 1.0
        %v858 = vadd.f32 %v842, 1.0
        %v859 = vadd.f32 %v843, 1.0
        %v860 = vadd.f32 %v844, 1.0
        %v861 = vadd.f32 %v845, 1.0
        %v862 = vadd.f32 %v846, 1.0
        %v863 = vadd.f32 %v847, 1.0
        %v864 = vadd.f32 %v848, 1.0
        %v865 = vadd.f32 %v849, 1.0
        %v866 = vadd.f32 %v850, 1.0
        %v867 = vadd.f32 %v851, 1.0
        %v868 = vmul.f32 %v804, %v852
        %v869 = vmul.f32 %v805, %v853
        %v870 = vmul.f32 %v806, %v854
        %v871 = vmul.f32 %v807, %v855
        %v872 = vmul.f32 %v808, %v856
        %v873 = vmul.f32 %v809, %v857
        %v874 = vmul.f32 %v810, %v858
        %v875 = vmul.f32 %v811, %v859
        %v876 = vmul.f32 %v812, %v860
        %v877 = vmul.f32 %v813, %v861
        %v878 = vmul.f32 %v814, %v862
        %v879 = vmul.f32 %v815, %v863
        %v880 = vmul.f32 %v816, %v864
        %v881 = vmul.f32 %v817, %v865
        %v882 = vmul.f32 %v818, %v866
        %v883 = vmul.f32 %v819, %v867
        %v884 = vlaneseq
        %v885 = vshrl.u32 %v884, 7
        %v886 = vsub.s32 0, %v885
        %v887 = vrot.slane %v255, %v886
        %888 = vmatprep.subr.mxu0 0.0
        %889 = vmatpush1.msra.mxu0 %v239
        %890 = vmatprep.subr.mxu0 0.0
        %891 = vmatpush1.msra.mxu0 %v240
        %892 = vmatprep.subr.mxu0 0.0
        %893 = vmatpush1.msra.mxu0 %v241
        %894 = vmatprep.subr.mxu0 0.0
        %895 = vmatpush1.msra.mxu0 %v242
        %896 = vmatprep.subr.mxu0 0.0
        %897 = vmatpush1.msra.mxu0 %v243
        %898 = vmatprep.subr.mxu0 0.0
        %899 = vmatpush1.msra.mxu0 %v244
        %900 = vmatprep.subr.mxu0 0.0
        %901 = vmatpush1.msra.mxu0 %v245
        %902 = vmatprep.subr.mxu0 0.0
        %903 = vmatpush1.msra.mxu0 %v246
        %904 = vmatprep.subr.mxu0 0.0
        %905 = vmatpush1.msra.mxu0 %v247
        %906 = vmatprep.subr.mxu0 0.0
        %907 = vmatpush1.msra.mxu0 %v248
        %908 = vmatprep.subr.mxu0 0.0
        %909 = vmatpush1.msra.mxu0 %v249
        %910 = vmatprep.subr.mxu0 0.0
        %911 = vmatpush1.msra.mxu0 %v250
        %912 = vmatprep.subr.mxu0 0.0
        %913 = vmatpush1.msra.mxu0 %v251
        %914 = vmatprep.subr.mxu0 0.0
        %915 = vmatpush1.msra.mxu0 %v252
        %916 = vmatprep.subr.mxu0 0.0
        %917 = vmatpush1.msra.mxu0 %v253
        %918 = vmatprep.subr.mxu0 0.0
        %919 = vmatpush1.msra.mxu0 %v254
        %920 = vmatprep.subr.mxu0 0.0
        %921 = vmatpush1.msra.mxu0 0.0
        %922 = vmatprep.subr.mxu0 0.0
        %923 = vmatpush1.msra.mxu0 0.0
        %924 = vmatprep.subr.mxu0 0.0
        %925 = vmatpush1.msra.mxu0 0.0
        %926 = vmatprep.subr.mxu0 0.0
        %927 = vmatpush1.msra.mxu0 0.0
        %928 = vmatprep.subr.mxu0 0.0
        %929 = vmatpush1.msra.mxu0 0.0
        %930 = vmatprep.subr.mxu0 0.0
        %931 = vmatpush1.msra.mxu0 0.0
        %932 = vmatprep.subr.mxu0 0.0
        %933 = vmatpush1.msra.mxu0 0.0
        %934 = vmatprep.subr.mxu0 0.0
        %935 = vmatpush1.msra.mxu0 0.0
        %936 = vmatprep.subr.mxu0 0.0
        %937 = vmatpush1.msra.mxu0 0.0
        %938 = vmatprep.subr.mxu0 0.0
        %939 = vmatpush1.msra.mxu0 0.0
        %940 = vmatprep.subr.mxu0 0.0
        %941 = vmatpush1.msra.mxu0 0.0
        %942 = vmatprep.subr.mxu0 0.0
        %943 = vmatpush1.msra.mxu0 0.0
        %944 = vmatprep.subr.mxu0 0.0
        %945 = vmatpush1.msra.mxu0 0.0
        %946 = vmatprep.subr.mxu0 0.0
        %947 = vmatpush1.msra.mxu0 0.0
        %948 = vmatprep.subr.mxu0 0.0
        %949 = vmatpush1.msra.mxu0 0.0
        %950 = vmatprep.subr.mxu0 0.0
        %951 = vmatpush1.msra.mxu0 0.0
        %952 = vmatprep.mubr.f32.mxu0 0.0
        %953 = vmatmul.mubr.f32.gmra.mrb[0].mxu0 %v868
        %v954 = vpop.f32.mrb[0].mxu0
        %v955 = vadd.f32 %v887, %v954
        %v956 = vpop.f32.mrb[0].mxu0
        %957 = vmatprep.mubr.f32.mxu0 0.0
        %958 = vmatmul.mubr.f32.gmra.mrb[0].mxu0 %v869
        %v959 = vpop.f32.mrb[0].mxu0
        %v960 = vadd.f32 %v887, %v959
        %v961 = vpop.f32.mrb[0].mxu0
        %962 = vmatprep.mubr.f32.mxu0 0.0
        %963 = vmatmul.mubr.f32.gmra.mrb[0].mxu0 %v870
        %v964 = vpop.f32.mrb[0].mxu0
        %v965 = vadd.f32 %v887, %v964
        %v966 = vpop.f32.mrb[0].mxu0
        %967 = vmatprep.mubr.f32.mxu0 0.0
        %968 = vmatmul.mubr.f32.gmra.mrb[0].mxu0 %v871
        %v969 = vpop.f32.mrb[0].mxu0
        %v970 = vadd.f32 %v887, %v969
        %v971 = vpop.f32.mrb[0].mxu0
        %972 = vmatprep.mubr.f32.mxu0 0.0
        %973 = vmatmul.mubr.f32.gmra.mrb[0].mxu0 %v872
        %v974 = vpop.f32.mrb[0].mxu0
        %v975 = vadd.f32 %v887, %v974
        %v976 = vpop.f32.mrb[0].mxu0
        %977 = vmatprep.mubr.f32.mxu0 0.0
        %978 = vmatmul.mubr.f32.gmra.mrb[0].mxu0 %v873
        %v979 = vpop.f32.mrb[0].mxu0
        %v980 = vadd.f32 %v887, %v979
        %v981 = vpop.f32.mrb[0].mxu0
        %982 = vmatprep.mubr.f32.mxu0 0.0
        %983 = vmatmul.mubr.f32.gmra.mrb[0].mxu0 %v874
        %v984 = vpop.f32.mrb[0].mxu0
        %v985 = vadd.f32 %v887, %v984
        %v986 = vpop.f32.mrb[0].mxu0
        %987 = vmatprep.mubr.f32.mxu0 0.0
        %988 = vmatmul.mubr.f32.gmra.mrb[0].mxu0 %v875
        %v989 = vpop.f32.mrb[0].mxu0
        %v990 = vadd.f32 %v887, %v989
        %v991 = vpop.f32.mrb[0].mxu0
        %992 = vmatprep.mubr.f32.mxu0 0.0
        %993 = vmatmul.mubr.f32.gmra.mrb[0].mxu0 %v876
        %v994 = vpop.f32.mrb[0].mxu0
        %v995 = vadd.f32 %v887, %v994
        %v996 = vpop.f32.mrb[0].mxu0
        %997 = vmatprep.mubr.f32.mxu0 0.0
        %998 = vmatmul.mubr.f32.gmra.mrb[0].mxu0 %v877
        %v999 = vpop.f32.mrb[0].mxu0
        %v1000 = vadd.f32 %v887, %v999
        %v1001 = vpop.f32.mrb[0].mxu0
        %1002 = vmatprep.mubr.f32.mxu0 0.0
        %1003 = vmatmul.mubr.f32.gmra.mrb[0].mxu0 %v878
        %v1004 = vpop.f32.mrb[0].mxu0
        %v1005 = vadd.f32 %v887, %v1004
        %v1006 = vpop.f32.mrb[0].mxu0
        %1007 = vmatprep.mubr.f32.mxu0 0.0
        %1008 = vmatmul.mubr.f32.gmra.mrb[0].mxu0 %v879
        %v1009 = vpop.f32.mrb[0].mxu0
        %v1010 = vadd.f32 %v887, %v1009
        %v1011 = vpop.f32.mrb[0].mxu0
        %1012 = vmatprep.mubr.f32.mxu0 0.0
        %1013 = vmatmul.mubr.f32.gmra.mrb[0].mxu0 %v880
        %v1014 = vpop.f32.mrb[0].mxu0
        %v1015 = vadd.f32 %v887, %v1014
        %v1016 = vpop.f32.mrb[0].mxu0
        %1017 = vmatprep.mubr.f32.mxu0 0.0
        %1018 = vmatmul.mubr.f32.gmra.mrb[0].mxu0 %v881
        %v1019 = vpop.f32.mrb[0].mxu0
        %v1020 = vadd.f32 %v887, %v1019
        %v1021 = vpop.f32.mrb[0].mxu0
        %1022 = vmatprep.mubr.f32.mxu0 0.0
        %1023 = vmatmul.mubr.f32.gmra.mrb[0].mxu0 %v882
        %v1024 = vpop.f32.mrb[0].mxu0
        %v1025 = vadd.f32 %v887, %v1024
        %v1026 = vpop.f32.mrb[0].mxu0
        %1027 = vmatprep.mubr.f32.mxu0 0.0
        %1028 = vmatmul.mubr.f32.gmra.mrb[0].mxu0 %v883
        %v1029 = vpop.f32.mrb[0].mxu0
        %v1030 = vadd.f32 %v887, %v1029
        %v1031 = vpop.f32.mrb[0].mxu0
        %1032 = vdwg.mxu0
        %1033 = vmatprep.subr.mxu0 %v340
        %1034 = vmatpush1.msra.mxu0 %v339
        %1035 = vmatprep.subr.mxu0 %v342
        %1036 = vmatpush1.msra.mxu0 %v341
        %1037 = vmatprep.subr.mxu0 %v344
        %1038 = vmatpush1.msra.mxu0 %v343
        %1039 = vmatprep.subr.mxu0 %v346
        %1040 = vmatpush1.msra.mxu0 %v345
        %1041 = vmatprep.subr.mxu0 %v348
        %1042 = vmatpush1.msra.mxu0 %v347
        %1043 = vmatprep.subr.mxu0 %v350
        %1044 = vmatpush1.msra.mxu0 %v349
        %1045 = vmatprep.subr.mxu0 %v352
        %1046 = vmatpush1.msra.mxu0 %v351
        %1047 = vmatprep.subr.mxu0 %v354
        %1048 = vmatpush1.msra.mxu0 %v353
        %1049 = vmatprep.subr.mxu0 %v356
        %1050 = vmatpush1.msra.mxu0 %v355
        %1051 = vmatprep.subr.mxu0 %v358
        %1052 = vmatpush1.msra.mxu0 %v357
        %1053 = vmatprep.subr.mxu0 %v360
        %1054 = vmatpush1.msra.mxu0 %v359
        %1055 = vmatprep.subr.mxu0 %v362
        %1056 = vmatpush1.msra.mxu0 %v361
        %1057 = vmatprep.subr.mxu0 %v364
        %1058 = vmatpush1.msra.mxu0 %v363
        %1059 = vmatprep.subr.mxu0 %v366
        %1060 = vmatpush1.msra.mxu0 %v365
        %1061 = vmatprep.subr.mxu0 %v368
        %1062 = vmatpush1.msra.mxu0 %v367
        %1063 = vmatprep.subr.mxu0 %v370
        %1064 = vmatpush1.msra.mxu0 %v369
        %1065 = vmatprep.subr.mxu0 0.0
        %1066 = vmatpush1.msra.mxu0 0.0
        %1067 = vmatprep.subr.mxu0 0.0
        %1068 = vmatpush1.msra.mxu0 0.0
        %1069 = vmatprep.subr.mxu0 0.0
        %1070 = vmatpush1.msra.mxu0 0.0
        %1071 = vmatprep.subr.mxu0 0.0
        %1072 = vmatpush1.msra.mxu0 0.0
        %1073 = vmatprep.subr.mxu0 0.0
        %1074 = vmatpush1.msra.mxu0 0.0
        %1075 = vmatprep.subr.mxu0 0.0
        %1076 = vmatpush1.msra.mxu0 0.0
        %1077 = vmatprep.subr.mxu0 0.0
        %1078 = vmatpush1.msra.mxu0 0.0
        %1079 = vmatprep.subr.mxu0 0.0
        %1080 = vmatpush1.msra.mxu0 0.0
        %1081 = vmatprep.subr.mxu0 0.0
        %1082 = vmatpush1.msra.mxu0 0.0
        %1083 = vmatprep.subr.mxu0 0.0
        %1084 = vmatpush1.msra.mxu0 0.0
        %1085 = vmatprep.subr.mxu0 0.0
        %1086 = vmatpush1.msra.mxu0 0.0
        %1087 = vmatprep.subr.mxu0 0.0
        %1088 = vmatpush1.msra.mxu0 0.0
        %1089 = vmatprep.subr.mxu0 0.0
        %1090 = vmatpush1.msra.mxu0 0.0
        %1091 = vmatprep.subr.mxu0 0.0
        %1092 = vmatpush1.msra.mxu0 0.0
        %1093 = vmatprep.subr.mxu0 0.0
        %1094 = vmatpush1.msra.mxu0 0.0
        %1095 = vmatprep.subr.mxu0 0.0
        %1096 = vmatpush1.msra.mxu0 0.0
        %1097 = vmatprep.mubr.f32.mxu0 0.0
        %1098 = vmatmul.mubr.f32.gmra.mrb[0].mxu0 %v955
        %v1099 = vpop.f32.mrb[0].mxu0
        %v1100 = vadd.f32 0.0, %v1099
        %v1101 = vpop.f32.mrb[0].mxu0
        %v1102 = vadd.f32 0.0, %v1101
        %1103 = vmatprep.mubr.f32.mxu0 0.0
        %1104 = vmatmul.mubr.f32.gmra.mrb[0].mxu0 %v960
        %v1105 = vpop.f32.mrb[0].mxu0
        %v1106 = vadd.f32 0.0, %v1105
        %v1107 = vpop.f32.mrb[0].mxu0
        %v1108 = vadd.f32 0.0, %v1107
        %1109 = vmatprep.mubr.f32.mxu0 0.0
        %1110 = vmatmul.mubr.f32.gmra.mrb[0].mxu0 %v965
        %v1111 = vpop.f32.mrb[0].mxu0
        %v1112 = vadd.f32 0.0, %v1111
        %v1113 = vpop.f32.mrb[0].mxu0
        %v1114 = vadd.f32 0.0, %v1113
        %1115 = vmatprep.mubr.f32.mxu0 0.0
        %1116 = vmatmul.mubr.f32.gmra.mrb[0].mxu0 %v970
        %v1117 = vpop.f32.mrb[0].mxu0
        %v1118 = vadd.f32 0.0, %v1117
        %v1119 = vpop.f32.mrb[0].mxu0
        %v1120 = vadd.f32 0.0, %v1119
        %1121 = vmatprep.mubr.f32.mxu0 0.0
        %1122 = vmatmul.mubr.f32.gmra.mrb[0].mxu0 %v975
        %v1123 = vpop.f32.mrb[0].mxu0
        %v1124 = vadd.f32 0.0, %v1123
        %v1125 = vpop.f32.mrb[0].mxu0
        %v1126 = vadd.f32 0.0, %v1125
        %1127 = vmatprep.mubr.f32.mxu0 0.0
        %1128 = vmatmul.mubr.f32.gmra.mrb[0].mxu0 %v980
        %v1129 = vpop.f32.mrb[0].mxu0
        %v1130 = vadd.f32 0.0, %v1129
        %v1131 = vpop.f32.mrb[0].mxu0
        %v1132 = vadd.f32 0.0, %v1131
        %1133 = vmatprep.mubr.f32.mxu0 0.0
        %1134 = vmatmul.mubr.f32.gmra.mrb[0].mxu0 %v985
        %v1135 = vpop.f32.mrb[0].mxu0
        %v1136 = vadd.f32 0.0, %v1135
        %v1137 = vpop.f32.mrb[0].mxu0
        %v1138 = vadd.f32 0.0, %v1137
        %1139 = vmatprep.mubr.f32.mxu0 0.0
        %1140 = vmatmul.mubr.f32.gmra.mrb[0].mxu0 %v990
        %v1141 = vpop.f32.mrb[0].mxu0
        %v1142 = vadd.f32 0.0, %v1141
        %v1143 = vpop.f32.mrb[0].mxu0
        %v1144 = vadd.f32 0.0, %v1143
        %1145 = vmatprep.mubr.f32.mxu0 0.0
        %1146 = vmatmul.mubr.f32.gmra.mrb[0].mxu0 %v995
        %v1147 = vpop.f32.mrb[0].mxu0
        %v1148 = vadd.f32 0.0, %v1147
        %v1149 = vpop.f32.mrb[0].mxu0
        %v1150 = vadd.f32 0.0, %v1149
        %1151 = vmatprep.mubr.f32.mxu0 0.0
        %1152 = vmatmul.mubr.f32.gmra.mrb[0].mxu0 %v1000
        %v1153 = vpop.f32.mrb[0].mxu0
        %v1154 = vadd.f32 0.0, %v1153
        %v1155 = vpop.f32.mrb[0].mxu0
        %v1156 = vadd.f32 0.0, %v1155
        %1157 = vmatprep.mubr.f32.mxu0 0.0
        %1158 = vmatmul.mubr.f32.gmra.mrb[0].mxu0 %v1005
        %v1159 = vpop.f32.mrb[0].mxu0
        %v1160 = vadd.f32 0.0, %v1159
        %v1161 = vpop.f32.mrb[0].mxu0
        %v1162 = vadd.f32 0.0, %v1161
        %1163 = vmatprep.mubr.f32.mxu0 0.0
        %1164 = vmatmul.mubr.f32.gmra.mrb[0].mxu0 %v1010
        %v1165 = vpop.f32.mrb[0].mxu0
        %v1166 = vadd.f32 0.0, %v1165
        %v1167 = vpop.f32.mrb[0].mxu0
        %v1168 = vadd.f32 0.0, %v1167
        %1169 = vmatprep.mubr.f32.mxu0 0.0
        %1170 = vmatmul.mubr.f32.gmra.mrb[0].mxu0 %v1015
        %v1171 = vpop.f32.mrb[0].mxu0
        %v1172 = vadd.f32 0.0, %v1171
        %v1173 = vpop.f32.mrb[0].mxu0
        %v1174 = vadd.f32 0.0, %v1173
        %1175 = vmatprep.mubr.f32.mxu0 0.0
        %1176 = vmatmul.mubr.f32.gmra.mrb[0].mxu0 %v1020
        %v1177 = vpop.f32.mrb[0].mxu0
        %v1178 = vadd.f32 0.0, %v1177
        %v1179 = vpop.f32.mrb[0].mxu0
        %v1180 = vadd.f32 0.0, %v1179
        %1181 = vmatprep.mubr.f32.mxu0 0.0
        %1182 = vmatmul.mubr.f32.gmra.mrb[0].mxu0 %v1025
        %v1183 = vpop.f32.mrb[0].mxu0
        %v1184 = vadd.f32 0.0, %v1183
        %v1185 = vpop.f32.mrb[0].mxu0
        %v1186 = vadd.f32 0.0, %v1185
        %1187 = vmatprep.mubr.f32.mxu0 0.0
        %1188 = vmatmul.mubr.f32.gmra.mrb[0].mxu0 %v1030
        %v1189 = vpop.f32.mrb[0].mxu0
        %v1190 = vadd.f32 0.0, %v1189
        %v1191 = vpop.f32.mrb[0].mxu0
        %v1192 = vadd.f32 0.0, %v1191
        %1193 = vdwg.mxu0
        %v1195 = vlaneseq
        %v1196 = vshrl.u32 %v1195, 7
        %v1197 = vsub.s32 0, %v1196
        %v1198 = vrot.slane %v372, %v1197
        %v1199 = vlaneseq
        %v1200 = vshrl.u32 %v1199, 7
        %v1201 = vsub.s32 1, %v1200
        %v1202 = vrot.slane %v372, %v1201
        %v1205 = vadd.f32 %v1198, %v1100
        %v1206 = vadd.f32 %v1202, %v1102
        %v1207 = vadd.f32 %v1198, %v1106
        %v1208 = vadd.f32 %v1202, %v1108
        %v1209 = vadd.f32 %v1198, %v1112
        %v1210 = vadd.f32 %v1202, %v1114
        %v1211 = vadd.f32 %v1198, %v1118
        %v1212 = vadd.f32 %v1202, %v1120
        %v1213 = vadd.f32 %v1198, %v1124
        %v1214 = vadd.f32 %v1202, %v1126
        %v1215 = vadd.f32 %v1198, %v1130
        %v1216 = vadd.f32 %v1202, %v1132
        %v1217 = vadd.f32 %v1198, %v1136
        %v1218 = vadd.f32 %v1202, %v1138
        %v1219 = vadd.f32 %v1198, %v1142
        %v1220 = vadd.f32 %v1202, %v1144
        %v1221 = vadd.f32 %v1198, %v1148
        %v1222 = vadd.f32 %v1202, %v1150
        %v1223 = vadd.f32 %v1198, %v1154
        %v1224 = vadd.f32 %v1202, %v1156
        %v1225 = vadd.f32 %v1198, %v1160
        %v1226 = vadd.f32 %v1202, %v1162
        %v1227 = vadd.f32 %v1198, %v1166
        %v1228 = vadd.f32 %v1202, %v1168
        %v1229 = vadd.f32 %v1198, %v1172
        %v1230 = vadd.f32 %v1202, %v1174
        %v1231 = vadd.f32 %v1198, %v1178
        %v1232 = vadd.f32 %v1202, %v1180
        %v1233 = vadd.f32 %v1198, %v1184
        %v1234 = vadd.f32 %v1202, %v1186
        %v1235 = vadd.f32 %v1198, %v1190
        %v1236 = vadd.f32 %v1202, %v1192
        %v1237 = vmin.f32 %v1205, %v1206
        %1238 = vmin.xlane.f32.xlu0 %v1237
        %v1239 = vpop.xlane.xlu0 %1238
        %v1240 = vmin.f32 %v1207, %v1208
        %1241 = vmin.xlane.f32.xlu0 %v1240
        %v1242 = vpop.xlane.xlu0 %1241
        %v1243 = vmin.f32 %v1209, %v1210
        %1244 = vmin.xlane.f32.xlu0 %v1243
        %v1245 = vpop.xlane.xlu0 %1244
        %v1246 = vmin.f32 %v1211, %v1212
        %1247 = vmin.xlane.f32.xlu0 %v1246
        %v1248 = vpop.xlane.xlu0 %1247
        %v1249 = vmin.f32 %v1213, %v1214
        %1250 = vmin.xlane.f32.xlu0 %v1249
        %v1251 = vpop.xlane.xlu0 %1250
        %v1252 = vmin.f32 %v1215, %v1216
        %1253 = vmin.xlane.f32.xlu0 %v1252
        %v1254 = vpop.xlane.xlu0 %1253
        %v1255 = vmin.f32 %v1217, %v1218
        %1256 = vmin.xlane.f32.xlu0 %v1255
        %v1257 = vpop.xlane.xlu0 %1256
        %v1258 = vmin.f32 %v1219, %v1220
        %1259 = vmin.xlane.f32.xlu0 %v1258
        %v1260 = vpop.xlane.xlu0 %1259
        %v1261 = vmin.f32 %v1221, %v1222
        %1262 = vmin.xlane.f32.xlu0 %v1261
        %v1263 = vpop.xlane.xlu0 %1262
        %v1264 = vmin.f32 %v1223, %v1224
        %1265 = vmin.xlane.f32.xlu0 %v1264
        %v1266 = vpop.xlane.xlu0 %1265
        %v1267 = vmin.f32 %v1225, %v1226
        %1268 = vmin.xlane.f32.xlu0 %v1267
        %v1269 = vpop.xlane.xlu0 %1268
        %v1270 = vmin.f32 %v1227, %v1228
        %1271 = vmin.xlane.f32.xlu0 %v1270
        %v1272 = vpop.xlane.xlu0 %1271
        %v1273 = vmin.f32 %v1229, %v1230
        %1274 = vmin.xlane.f32.xlu0 %v1273
        %v1275 = vpop.xlane.xlu0 %1274
        %v1276 = vmin.f32 %v1231, %v1232
        %1277 = vmin.xlane.f32.xlu0 %v1276
        %v1278 = vpop.xlane.xlu0 %1277
        %v1279 = vmin.f32 %v1233, %v1234
        %1280 = vmin.xlane.f32.xlu0 %v1279
        %v1281 = vpop.xlane.xlu0 %1280
        %v1282 = vmin.f32 %v1235, %v1236
        %1283 = vmin.xlane.f32.xlu0 %v1282
        %v1284 = vpop.xlane.xlu0 %1283
        %v1285 = vlaneseq
        %v1286 = vand.u32 %v1285, 127
        %v1287 = vadd.s32 %v1286, 128
        %vm1288 = vcmp.eq.f32.partialorder %v1205, %v1239
        %vm1289 = vcmp.eq.f32.partialorder %v1206, %v1239
        %vm1290 = vcmp.eq.f32.partialorder %v1207, %v1242
        %vm1291 = vcmp.eq.f32.partialorder %v1208, %v1242
        %vm1292 = vcmp.eq.f32.partialorder %v1209, %v1245
        %vm1293 = vcmp.eq.f32.partialorder %v1210, %v1245
        %vm1294 = vcmp.eq.f32.partialorder %v1211, %v1248
        %vm1295 = vcmp.eq.f32.partialorder %v1212, %v1248
        %vm1296 = vcmp.eq.f32.partialorder %v1213, %v1251
        %vm1297 = vcmp.eq.f32.partialorder %v1214, %v1251
        %vm1298 = vcmp.eq.f32.partialorder %v1215, %v1254
        %vm1299 = vcmp.eq.f32.partialorder %v1216, %v1254
        %vm1300 = vcmp.eq.f32.partialorder %v1217, %v1257
        %vm1301 = vcmp.eq.f32.partialorder %v1218, %v1257
        %vm1302 = vcmp.eq.f32.partialorder %v1219, %v1260
        %vm1303 = vcmp.eq.f32.partialorder %v1220, %v1260
        %vm1304 = vcmp.eq.f32.partialorder %v1221, %v1263
        %vm1305 = vcmp.eq.f32.partialorder %v1222, %v1263
        %vm1306 = vcmp.eq.f32.partialorder %v1223, %v1266
        %vm1307 = vcmp.eq.f32.partialorder %v1224, %v1266
        %vm1308 = vcmp.eq.f32.partialorder %v1225, %v1269
        %vm1309 = vcmp.eq.f32.partialorder %v1226, %v1269
        %vm1310 = vcmp.eq.f32.partialorder %v1227, %v1272
        %vm1311 = vcmp.eq.f32.partialorder %v1228, %v1272
        %vm1312 = vcmp.eq.f32.partialorder %v1229, %v1275
        %vm1313 = vcmp.eq.f32.partialorder %v1230, %v1275
        %vm1314 = vcmp.eq.f32.partialorder %v1231, %v1278
        %vm1315 = vcmp.eq.f32.partialorder %v1232, %v1278
        %vm1316 = vcmp.eq.f32.partialorder %v1233, %v1281
        %vm1317 = vcmp.eq.f32.partialorder %v1234, %v1281
        %vm1318 = vcmp.eq.f32.partialorder %v1235, %v1284
        %vm1319 = vcmp.eq.f32.partialorder %v1236, %v1284
        %v1320 = vsel %vm1288, %v1286, 256
        %v1321 = vsel %vm1289, %v1287, 256
        %v1322 = vsel %vm1290, %v1286, 256
        %v1323 = vsel %vm1291, %v1287, 256
        %v1324 = vsel %vm1292, %v1286, 256
        %v1325 = vsel %vm1293, %v1287, 256
        %v1326 = vsel %vm1294, %v1286, 256
        %v1327 = vsel %vm1295, %v1287, 256
        %v1328 = vsel %vm1296, %v1286, 256
        %v1329 = vsel %vm1297, %v1287, 256
        %v1330 = vsel %vm1298, %v1286, 256
        %v1331 = vsel %vm1299, %v1287, 256
        %v1332 = vsel %vm1300, %v1286, 256
        %v1333 = vsel %vm1301, %v1287, 256
        %v1334 = vsel %vm1302, %v1286, 256
        %v1335 = vsel %vm1303, %v1287, 256
        %v1336 = vsel %vm1304, %v1286, 256
        %v1337 = vsel %vm1305, %v1287, 256
        %v1338 = vsel %vm1306, %v1286, 256
        %v1339 = vsel %vm1307, %v1287, 256
        %v1340 = vsel %vm1308, %v1286, 256
        %v1341 = vsel %vm1309, %v1287, 256
        %v1342 = vsel %vm1310, %v1286, 256
        %v1343 = vsel %vm1311, %v1287, 256
        %v1344 = vsel %vm1312, %v1286, 256
        %v1345 = vsel %vm1313, %v1287, 256
        %v1346 = vsel %vm1314, %v1286, 256
        %v1347 = vsel %vm1315, %v1287, 256
        %v1348 = vsel %vm1316, %v1286, 256
        %v1349 = vsel %vm1317, %v1287, 256
        %v1350 = vsel %vm1318, %v1286, 256
        %v1351 = vsel %vm1319, %v1287, 256
        %vm1352 = vcmp.lt.s32.totalorder %v1320, %v1321
        %v1353 = vsel %vm1352, %v1320, %v1321
        %v1354 = vand.u32 %v1353, 65535
        %v1355 = vshra.s32 %v1353, 16
        %v1356 = vcvt.s32.f32 %v1354
        %v1357 = vcvt.s32.f32 %v1355
        %1358 = vmin.xlane.f32.xlu0 %v1357
        %v1359 = vpop.xlane.xlu0 %1358
        %vm1360 = vcmp.eq.f32.partialorder %v1357, %v1359
        %v1361 = vsel %vm1360, %v1356, inf
        %1362 = vmin.xlane.f32.xlu0 %v1361
        %v1363 = vpop.xlane.xlu0 %1362
        %v1364 = vcvt.f32.s32 %v1363
        %v1365 = vcvt.f32.s32 %v1359
        %v1366 = vshll.u32 %v1365, 16
        %v1367 = vadd.s32 %v1366, %v1364
        %vm1368 = vcmp.lt.s32.totalorder %v1322, %v1323
        %v1369 = vsel %vm1368, %v1322, %v1323
        %v1370 = vand.u32 %v1369, 65535
        %v1371 = vshra.s32 %v1369, 16
        %v1372 = vcvt.s32.f32 %v1370
        %v1373 = vcvt.s32.f32 %v1371
        %1374 = vmin.xlane.f32.xlu0 %v1373
        %v1375 = vpop.xlane.xlu0 %1374
        %vm1376 = vcmp.eq.f32.partialorder %v1373, %v1375
        %v1377 = vsel %vm1376, %v1372, inf
        %1378 = vmin.xlane.f32.xlu0 %v1377
        %v1379 = vpop.xlane.xlu0 %1378
        %v1380 = vcvt.f32.s32 %v1379
        %v1381 = vcvt.f32.s32 %v1375
        %v1382 = vshll.u32 %v1381, 16
        %v1383 = vadd.s32 %v1382, %v1380
        %vm1384 = vcmp.lt.s32.totalorder %v1324, %v1325
        %v1385 = vsel %vm1384, %v1324, %v1325
        %v1386 = vand.u32 %v1385, 65535
        %v1387 = vshra.s32 %v1385, 16
        %v1388 = vcvt.s32.f32 %v1386
        %v1389 = vcvt.s32.f32 %v1387
        %1390 = vmin.xlane.f32.xlu0 %v1389
        %v1391 = vpop.xlane.xlu0 %1390
        %vm1392 = vcmp.eq.f32.partialorder %v1389, %v1391
        %v1393 = vsel %vm1392, %v1388, inf
        %1394 = vmin.xlane.f32.xlu0 %v1393
        %v1395 = vpop.xlane.xlu0 %1394
        %v1396 = vcvt.f32.s32 %v1395
        %v1397 = vcvt.f32.s32 %v1391
        %v1398 = vshll.u32 %v1397, 16
        %v1399 = vadd.s32 %v1398, %v1396
        %vm1400 = vcmp.lt.s32.totalorder %v1326, %v1327
        %v1401 = vsel %vm1400, %v1326, %v1327
        %v1402 = vand.u32 %v1401, 65535
        %v1403 = vshra.s32 %v1401, 16
        %v1404 = vcvt.s32.f32 %v1402
        %v1405 = vcvt.s32.f32 %v1403
        %1406 = vmin.xlane.f32.xlu0 %v1405
        %v1407 = vpop.xlane.xlu0 %1406
        %vm1408 = vcmp.eq.f32.partialorder %v1405, %v1407
        %v1409 = vsel %vm1408, %v1404, inf
        %1410 = vmin.xlane.f32.xlu0 %v1409
        %v1411 = vpop.xlane.xlu0 %1410
        %v1412 = vcvt.f32.s32 %v1411
        %v1413 = vcvt.f32.s32 %v1407
        %v1414 = vshll.u32 %v1413, 16
        %v1415 = vadd.s32 %v1414, %v1412
        %vm1416 = vcmp.lt.s32.totalorder %v1328, %v1329
        %v1417 = vsel %vm1416, %v1328, %v1329
        %v1418 = vand.u32 %v1417, 65535
        %v1419 = vshra.s32 %v1417, 16
        %v1420 = vcvt.s32.f32 %v1418
        %v1421 = vcvt.s32.f32 %v1419
        %1422 = vmin.xlane.f32.xlu0 %v1421
        %v1423 = vpop.xlane.xlu0 %1422
        %vm1424 = vcmp.eq.f32.partialorder %v1421, %v1423
        %v1425 = vsel %vm1424, %v1420, inf
        %1426 = vmin.xlane.f32.xlu0 %v1425
        %v1427 = vpop.xlane.xlu0 %1426
        %v1428 = vcvt.f32.s32 %v1427
        %v1429 = vcvt.f32.s32 %v1423
        %v1430 = vshll.u32 %v1429, 16
        %v1431 = vadd.s32 %v1430, %v1428
        %vm1432 = vcmp.lt.s32.totalorder %v1330, %v1331
        %v1433 = vsel %vm1432, %v1330, %v1331
        %v1434 = vand.u32 %v1433, 65535
        %v1435 = vshra.s32 %v1433, 16
        %v1436 = vcvt.s32.f32 %v1434
        %v1437 = vcvt.s32.f32 %v1435
        %1438 = vmin.xlane.f32.xlu0 %v1437
        %v1439 = vpop.xlane.xlu0 %1438
        %vm1440 = vcmp.eq.f32.partialorder %v1437, %v1439
        %v1441 = vsel %vm1440, %v1436, inf
        %1442 = vmin.xlane.f32.xlu0 %v1441
        %v1443 = vpop.xlane.xlu0 %1442
        %v1444 = vcvt.f32.s32 %v1443
        %v1445 = vcvt.f32.s32 %v1439
        %v1446 = vshll.u32 %v1445, 16
        %v1447 = vadd.s32 %v1446, %v1444
        %vm1448 = vcmp.lt.s32.totalorder %v1332, %v1333
        %v1449 = vsel %vm1448, %v1332, %v1333
        %v1450 = vand.u32 %v1449, 65535
        %v1451 = vshra.s32 %v1449, 16
        %v1452 = vcvt.s32.f32 %v1450
        %v1453 = vcvt.s32.f32 %v1451
        %1454 = vmin.xlane.f32.xlu0 %v1453
        %v1455 = vpop.xlane.xlu0 %1454
        %vm1456 = vcmp.eq.f32.partialorder %v1453, %v1455
        %v1457 = vsel %vm1456, %v1452, inf
        %1458 = vmin.xlane.f32.xlu0 %v1457
        %v1459 = vpop.xlane.xlu0 %1458
        %v1460 = vcvt.f32.s32 %v1459
        %v1461 = vcvt.f32.s32 %v1455
        %v1462 = vshll.u32 %v1461, 16
        %v1463 = vadd.s32 %v1462, %v1460
        %vm1464 = vcmp.lt.s32.totalorder %v1334, %v1335
        %v1465 = vsel %vm1464, %v1334, %v1335
        %v1466 = vand.u32 %v1465, 65535
        %v1467 = vshra.s32 %v1465, 16
        %v1468 = vcvt.s32.f32 %v1466
        %v1469 = vcvt.s32.f32 %v1467
        %1470 = vmin.xlane.f32.xlu0 %v1469
        %v1471 = vpop.xlane.xlu0 %1470
        %vm1472 = vcmp.eq.f32.partialorder %v1469, %v1471
        %v1473 = vsel %vm1472, %v1468, inf
        %1474 = vmin.xlane.f32.xlu0 %v1473
        %v1475 = vpop.xlane.xlu0 %1474
        %v1476 = vcvt.f32.s32 %v1475
        %v1477 = vcvt.f32.s32 %v1471
        %v1478 = vshll.u32 %v1477, 16
        %v1479 = vadd.s32 %v1478, %v1476
        %vm1480 = vcmp.lt.s32.totalorder %v1336, %v1337
        %v1481 = vsel %vm1480, %v1336, %v1337
        %v1482 = vand.u32 %v1481, 65535
        %v1483 = vshra.s32 %v1481, 16
        %v1484 = vcvt.s32.f32 %v1482
        %v1485 = vcvt.s32.f32 %v1483
        %1486 = vmin.xlane.f32.xlu0 %v1485
        %v1487 = vpop.xlane.xlu0 %1486
        %vm1488 = vcmp.eq.f32.partialorder %v1485, %v1487
        %v1489 = vsel %vm1488, %v1484, inf
        %1490 = vmin.xlane.f32.xlu0 %v1489
        %v1491 = vpop.xlane.xlu0 %1490
        %v1492 = vcvt.f32.s32 %v1491
        %v1493 = vcvt.f32.s32 %v1487
        %v1494 = vshll.u32 %v1493, 16
        %v1495 = vadd.s32 %v1494, %v1492
        %vm1496 = vcmp.lt.s32.totalorder %v1338, %v1339
        %v1497 = vsel %vm1496, %v1338, %v1339
        %v1498 = vand.u32 %v1497, 65535
        %v1499 = vshra.s32 %v1497, 16
        %v1500 = vcvt.s32.f32 %v1498
        %v1501 = vcvt.s32.f32 %v1499
        %1502 = vmin.xlane.f32.xlu0 %v1501
        %v1503 = vpop.xlane.xlu0 %1502
        %vm1504 = vcmp.eq.f32.partialorder %v1501, %v1503
        %v1505 = vsel %vm1504, %v1500, inf
        %1506 = vmin.xlane.f32.xlu0 %v1505
        %v1507 = vpop.xlane.xlu0 %1506
        %v1508 = vcvt.f32.s32 %v1507
        %v1509 = vcvt.f32.s32 %v1503
        %v1510 = vshll.u32 %v1509, 16
        %v1511 = vadd.s32 %v1510, %v1508
        %vm1512 = vcmp.lt.s32.totalorder %v1340, %v1341
        %v1513 = vsel %vm1512, %v1340, %v1341
        %v1514 = vand.u32 %v1513, 65535
        %v1515 = vshra.s32 %v1513, 16
        %v1516 = vcvt.s32.f32 %v1514
        %v1517 = vcvt.s32.f32 %v1515
        %1518 = vmin.xlane.f32.xlu0 %v1517
        %v1519 = vpop.xlane.xlu0 %1518
        %vm1520 = vcmp.eq.f32.partialorder %v1517, %v1519
        %v1521 = vsel %vm1520, %v1516, inf
        %1522 = vmin.xlane.f32.xlu0 %v1521
        %v1523 = vpop.xlane.xlu0 %1522
        %v1524 = vcvt.f32.s32 %v1523
        %v1525 = vcvt.f32.s32 %v1519
        %v1526 = vshll.u32 %v1525, 16
        %v1527 = vadd.s32 %v1526, %v1524
        %vm1528 = vcmp.lt.s32.totalorder %v1342, %v1343
        %v1529 = vsel %vm1528, %v1342, %v1343
        %v1530 = vand.u32 %v1529, 65535
        %v1531 = vshra.s32 %v1529, 16
        %v1532 = vcvt.s32.f32 %v1530
        %v1533 = vcvt.s32.f32 %v1531
        %1534 = vmin.xlane.f32.xlu0 %v1533
        %v1535 = vpop.xlane.xlu0 %1534
        %vm1536 = vcmp.eq.f32.partialorder %v1533, %v1535
        %v1537 = vsel %vm1536, %v1532, inf
        %1538 = vmin.xlane.f32.xlu0 %v1537
        %v1539 = vpop.xlane.xlu0 %1538
        %v1540 = vcvt.f32.s32 %v1539
        %v1541 = vcvt.f32.s32 %v1535
        %v1542 = vshll.u32 %v1541, 16
        %v1543 = vadd.s32 %v1542, %v1540
        %vm1544 = vcmp.lt.s32.totalorder %v1344, %v1345
        %v1545 = vsel %vm1544, %v1344, %v1345
        %v1546 = vand.u32 %v1545, 65535
        %v1547 = vshra.s32 %v1545, 16
        %v1548 = vcvt.s32.f32 %v1546
        %v1549 = vcvt.s32.f32 %v1547
        %1550 = vmin.xlane.f32.xlu0 %v1549
        %v1551 = vpop.xlane.xlu0 %1550
        %vm1552 = vcmp.eq.f32.partialorder %v1549, %v1551
        %v1553 = vsel %vm1552, %v1548, inf
        %1554 = vmin.xlane.f32.xlu0 %v1553
        %v1555 = vpop.xlane.xlu0 %1554
        %v1556 = vcvt.f32.s32 %v1555
        %v1557 = vcvt.f32.s32 %v1551
        %v1558 = vshll.u32 %v1557, 16
        %v1559 = vadd.s32 %v1558, %v1556
        %vm1560 = vcmp.lt.s32.totalorder %v1346, %v1347
        %v1561 = vsel %vm1560, %v1346, %v1347
        %v1562 = vand.u32 %v1561, 65535
        %v1563 = vshra.s32 %v1561, 16
        %v1564 = vcvt.s32.f32 %v1562
        %v1565 = vcvt.s32.f32 %v1563
        %1566 = vmin.xlane.f32.xlu0 %v1565
        %v1567 = vpop.xlane.xlu0 %1566
        %vm1568 = vcmp.eq.f32.partialorder %v1565, %v1567
        %v1569 = vsel %vm1568, %v1564, inf
        %1570 = vmin.xlane.f32.xlu0 %v1569
        %v1571 = vpop.xlane.xlu0 %1570
        %v1572 = vcvt.f32.s32 %v1571
        %v1573 = vcvt.f32.s32 %v1567
        %v1574 = vshll.u32 %v1573, 16
        %v1575 = vadd.s32 %v1574, %v1572
        %vm1576 = vcmp.lt.s32.totalorder %v1348, %v1349
        %v1577 = vsel %vm1576, %v1348, %v1349
        %v1578 = vand.u32 %v1577, 65535
        %v1579 = vshra.s32 %v1577, 16
        %v1580 = vcvt.s32.f32 %v1578
        %v1581 = vcvt.s32.f32 %v1579
        %1582 = vmin.xlane.f32.xlu0 %v1581
        %v1583 = vpop.xlane.xlu0 %1582
        %vm1584 = vcmp.eq.f32.partialorder %v1581, %v1583
        %v1585 = vsel %vm1584, %v1580, inf
        %1586 = vmin.xlane.f32.xlu0 %v1585
        %v1587 = vpop.xlane.xlu0 %1586
        %v1588 = vcvt.f32.s32 %v1587
        %v1589 = vcvt.f32.s32 %v1583
        %v1590 = vshll.u32 %v1589, 16
        %v1591 = vadd.s32 %v1590, %v1588
        %vm1592 = vcmp.lt.s32.totalorder %v1350, %v1351
        %v1593 = vsel %vm1592, %v1350, %v1351
        %v1594 = vand.u32 %v1593, 65535
        %v1595 = vshra.s32 %v1593, 16
        %v1596 = vcvt.s32.f32 %v1594
        %v1597 = vcvt.s32.f32 %v1595
        %1598 = vmin.xlane.f32.xlu0 %v1597
        %v1599 = vpop.xlane.xlu0 %1598
        %vm1600 = vcmp.eq.f32.partialorder %v1597, %v1599
        %v1601 = vsel %vm1600, %v1596, inf
        %1602 = vmin.xlane.f32.xlu0 %v1601
        %v1603 = vpop.xlane.xlu0 %1602
        %v1604 = vcvt.f32.s32 %v1603
        %v1605 = vcvt.f32.s32 %v1599
        %v1606 = vshll.u32 %v1605, 16
        %v1607 = vadd.s32 %v1606, %v1604
        %vm1608 = vcmp.eq.s32.totalorder %v1286, %v1367
        %vm1609 = vcmp.eq.s32.totalorder %v1287, %v1367
        %vm1610 = vcmp.eq.s32.totalorder %v1286, %v1383
        %vm1611 = vcmp.eq.s32.totalorder %v1287, %v1383
        %vm1612 = vcmp.eq.s32.totalorder %v1286, %v1399
        %vm1613 = vcmp.eq.s32.totalorder %v1287, %v1399
        %vm1614 = vcmp.eq.s32.totalorder %v1286, %v1415
        %vm1615 = vcmp.eq.s32.totalorder %v1287, %v1415
        %vm1616 = vcmp.eq.s32.totalorder %v1286, %v1431
        %vm1617 = vcmp.eq.s32.totalorder %v1287, %v1431
        %vm1618 = vcmp.eq.s32.totalorder %v1286, %v1447
        %vm1619 = vcmp.eq.s32.totalorder %v1287, %v1447
        %vm1620 = vcmp.eq.s32.totalorder %v1286, %v1463
        %vm1621 = vcmp.eq.s32.totalorder %v1287, %v1463
        %vm1622 = vcmp.eq.s32.totalorder %v1286, %v1479
        %vm1623 = vcmp.eq.s32.totalorder %v1287, %v1479
        %vm1624 = vcmp.eq.s32.totalorder %v1286, %v1495
        %vm1625 = vcmp.eq.s32.totalorder %v1287, %v1495
        %vm1626 = vcmp.eq.s32.totalorder %v1286, %v1511
        %vm1627 = vcmp.eq.s32.totalorder %v1287, %v1511
        %vm1628 = vcmp.eq.s32.totalorder %v1286, %v1527
        %vm1629 = vcmp.eq.s32.totalorder %v1287, %v1527
        %vm1630 = vcmp.eq.s32.totalorder %v1286, %v1543
        %vm1631 = vcmp.eq.s32.totalorder %v1287, %v1543
        %vm1632 = vcmp.eq.s32.totalorder %v1286, %v1559
        %vm1633 = vcmp.eq.s32.totalorder %v1287, %v1559
        %vm1634 = vcmp.eq.s32.totalorder %v1286, %v1575
        %vm1635 = vcmp.eq.s32.totalorder %v1287, %v1575
        %vm1636 = vcmp.eq.s32.totalorder %v1286, %v1591
        %vm1637 = vcmp.eq.s32.totalorder %v1287, %v1591
        %vm1638 = vcmp.eq.s32.totalorder %v1286, %v1607
        %vm1639 = vcmp.eq.s32.totalorder %v1287, %v1607
        %v1640 = vsel %vm1608, 1, 0
        %v1641 = vsel %vm1609, 1, 0
        %v1642 = vsel %vm1610, 1, 0
        %v1643 = vsel %vm1611, 1, 0
        %v1644 = vsel %vm1612, 1, 0
        %v1645 = vsel %vm1613, 1, 0
        %v1646 = vsel %vm1614, 1, 0
        %v1647 = vsel %vm1615, 1, 0
        %v1648 = vsel %vm1616, 1, 0
        %v1649 = vsel %vm1617, 1, 0
        %v1650 = vsel %vm1618, 1, 0
        %v1651 = vsel %vm1619, 1, 0
        %v1652 = vsel %vm1620, 1, 0
        %v1653 = vsel %vm1621, 1, 0
        %v1654 = vsel %vm1622, 1, 0
        %v1655 = vsel %vm1623, 1, 0
        %v1656 = vsel %vm1624, 1, 0
        %v1657 = vsel %vm1625, 1, 0
        %v1658 = vsel %vm1626, 1, 0
        %v1659 = vsel %vm1627, 1, 0
        %v1660 = vsel %vm1628, 1, 0
        %v1661 = vsel %vm1629, 1, 0
        %v1662 = vsel %vm1630, 1, 0
        %v1663 = vsel %vm1631, 1, 0
        %v1664 = vsel %vm1632, 1, 0
        %v1665 = vsel %vm1633, 1, 0
        %v1666 = vsel %vm1634, 1, 0
        %v1667 = vsel %vm1635, 1, 0
        %v1668 = vsel %vm1636, 1, 0
        %v1669 = vsel %vm1637, 1, 0
        %v1670 = vsel %vm1638, 1, 0
        %v1671 = vsel %vm1639, 1, 0
        %v1672 = vcvt.s32.f32 %v1640
        %v1673 = vcvt.s32.f32 %v1641
        %v1674 = vcvt.s32.f32 %v1642
        %v1675 = vcvt.s32.f32 %v1643
        %v1676 = vcvt.s32.f32 %v1644
        %v1677 = vcvt.s32.f32 %v1645
        %v1678 = vcvt.s32.f32 %v1646
        %v1679 = vcvt.s32.f32 %v1647
        %v1680 = vcvt.s32.f32 %v1648
        %v1681 = vcvt.s32.f32 %v1649
        %v1682 = vcvt.s32.f32 %v1650
        %v1683 = vcvt.s32.f32 %v1651
        %v1684 = vcvt.s32.f32 %v1652
        %v1685 = vcvt.s32.f32 %v1653
        %v1686 = vcvt.s32.f32 %v1654
        %v1687 = vcvt.s32.f32 %v1655
        %v1688 = vcvt.s32.f32 %v1656
        %v1689 = vcvt.s32.f32 %v1657
        %v1690 = vcvt.s32.f32 %v1658
        %v1691 = vcvt.s32.f32 %v1659
        %v1692 = vcvt.s32.f32 %v1660
        %v1693 = vcvt.s32.f32 %v1661
        %v1694 = vcvt.s32.f32 %v1662
        %v1695 = vcvt.s32.f32 %v1663
        %v1696 = vcvt.s32.f32 %v1664
        %v1697 = vcvt.s32.f32 %v1665
        %v1698 = vcvt.s32.f32 %v1666
        %v1699 = vcvt.s32.f32 %v1667
        %v1700 = vcvt.s32.f32 %v1668
        %v1701 = vcvt.s32.f32 %v1669
        %v1702 = vcvt.s32.f32 %v1670
        %v1703 = vcvt.s32.f32 %v1671
        %1704 = vmatprep.subr.mxu0 0.0
        %1705 = vmatpush1.msra.mxu0 %v307
        %1706 = vmatprep.subr.mxu0 0.0
        %1707 = vmatpush1.msra.mxu0 %v308
        %1708 = vmatprep.subr.mxu0 0.0
        %1709 = vmatpush1.msra.mxu0 %v309
        %1710 = vmatprep.subr.mxu0 0.0
        %1711 = vmatpush1.msra.mxu0 %v310
        %1712 = vmatprep.subr.mxu0 0.0
        %1713 = vmatpush1.msra.mxu0 %v311
        %1714 = vmatprep.subr.mxu0 0.0
        %1715 = vmatpush1.msra.mxu0 %v312
        %1716 = vmatprep.subr.mxu0 0.0
        %1717 = vmatpush1.msra.mxu0 %v313
        %1718 = vmatprep.subr.mxu0 0.0
        %1719 = vmatpush1.msra.mxu0 %v314
        %1720 = vmatprep.subr.mxu0 0.0
        %1721 = vmatpush1.msra.mxu0 %v315
        %1722 = vmatprep.subr.mxu0 0.0
        %1723 = vmatpush1.msra.mxu0 %v316
        %1724 = vmatprep.subr.mxu0 0.0
        %1725 = vmatpush1.msra.mxu0 %v317
        %1726 = vmatprep.subr.mxu0 0.0
        %1727 = vmatpush1.msra.mxu0 %v318
        %1728 = vmatprep.subr.mxu0 0.0
        %1729 = vmatpush1.msra.mxu0 %v319
        %1730 = vmatprep.subr.mxu0 0.0
        %1731 = vmatpush1.msra.mxu0 %v320
        %1732 = vmatprep.subr.mxu0 0.0
        %1733 = vmatpush1.msra.mxu0 %v321
        %1734 = vmatprep.subr.mxu0 0.0
        %1735 = vmatpush1.msra.mxu0 %v322
        %1736 = vmatprep.subr.mxu0 0.0
        %1737 = vmatpush1.msra.mxu0 %v323
        %1738 = vmatprep.subr.mxu0 0.0
        %1739 = vmatpush1.msra.mxu0 %v324
        %1740 = vmatprep.subr.mxu0 0.0
        %1741 = vmatpush1.msra.mxu0 %v325
        %1742 = vmatprep.subr.mxu0 0.0
        %1743 = vmatpush1.msra.mxu0 %v326
        %1744 = vmatprep.subr.mxu0 0.0
        %1745 = vmatpush1.msra.mxu0 %v327
        %1746 = vmatprep.subr.mxu0 0.0
        %1747 = vmatpush1.msra.mxu0 %v328
        %1748 = vmatprep.subr.mxu0 0.0
        %1749 = vmatpush1.msra.mxu0 %v329
        %1750 = vmatprep.subr.mxu0 0.0
        %1751 = vmatpush1.msra.mxu0 %v330
        %1752 = vmatprep.subr.mxu0 0.0
        %1753 = vmatpush1.msra.mxu0 %v331
        %1754 = vmatprep.subr.mxu0 0.0
        %1755 = vmatpush1.msra.mxu0 %v332
        %1756 = vmatprep.subr.mxu0 0.0
        %1757 = vmatpush1.msra.mxu0 %v333
        %1758 = vmatprep.subr.mxu0 0.0
        %1759 = vmatpush1.msra.mxu0 %v334
        %1760 = vmatprep.subr.mxu0 0.0
        %1761 = vmatpush1.msra.mxu0 %v335
        %1762 = vmatprep.subr.mxu0 0.0
        %1763 = vmatpush1.msra.mxu0 %v336
        %1764 = vmatprep.subr.mxu0 0.0
        %1765 = vmatpush1.msra.mxu0 %v337
        %1766 = vmatprep.subr.mxu0 0.0
        %1767 = vmatpush1.msra.mxu0 %v338
        %1768 = vmatprep.mubr.f32.mxu0 %v1673
        %1769 = vmatmul.mubr.f32.gmra.mrb[0].mxu0 %v1672
        %v1770 = vpop.f32.mrb[0].mxu0
        %v1771 = vadd.f32 0.0, %v1770
        %v1772 = vpop.f32.mrb[0].mxu0
        %1773 = vmatprep.mubr.f32.mxu0 %v1675
        %1774 = vmatmul.mubr.f32.gmra.mrb[0].mxu0 %v1674
        %v1775 = vpop.f32.mrb[0].mxu0
        %v1776 = vadd.f32 0.0, %v1775
        %v1777 = vpop.f32.mrb[0].mxu0
        %1778 = vmatprep.mubr.f32.mxu0 %v1677
        %1779 = vmatmul.mubr.f32.gmra.mrb[0].mxu0 %v1676
        %v1780 = vpop.f32.mrb[0].mxu0
        %v1781 = vadd.f32 0.0, %v1780
        %v1782 = vpop.f32.mrb[0].mxu0
        %1783 = vmatprep.mubr.f32.mxu0 %v1679
        %1784 = vmatmul.mubr.f32.gmra.mrb[0].mxu0 %v1678
        %v1785 = vpop.f32.mrb[0].mxu0
        %v1786 = vadd.f32 0.0, %v1785
        %v1787 = vpop.f32.mrb[0].mxu0
        %1788 = vmatprep.mubr.f32.mxu0 %v1681
        %1789 = vmatmul.mubr.f32.gmra.mrb[0].mxu0 %v1680
        %v1790 = vpop.f32.mrb[0].mxu0
        %v1791 = vadd.f32 0.0, %v1790
        %v1792 = vpop.f32.mrb[0].mxu0
        %1793 = vmatprep.mubr.f32.mxu0 %v1683
        %1794 = vmatmul.mubr.f32.gmra.mrb[0].mxu0 %v1682
        %v1795 = vpop.f32.mrb[0].mxu0
        %v1796 = vadd.f32 0.0, %v1795
        %v1797 = vpop.f32.mrb[0].mxu0
        %1798 = vmatprep.mubr.f32.mxu0 %v1685
        %1799 = vmatmul.mubr.f32.gmra.mrb[0].mxu0 %v1684
        %v1800 = vpop.f32.mrb[0].mxu0
        %v1801 = vadd.f32 0.0, %v1800
        %v1802 = vpop.f32.mrb[0].mxu0
        %1803 = vmatprep.mubr.f32.mxu0 %v1687
        %1804 = vmatmul.mubr.f32.gmra.mrb[0].mxu0 %v1686
        %v1805 = vpop.f32.mrb[0].mxu0
        %v1806 = vadd.f32 0.0, %v1805
        %v1807 = vpop.f32.mrb[0].mxu0
        %1808 = vmatprep.mubr.f32.mxu0 %v1689
        %1809 = vmatmul.mubr.f32.gmra.mrb[0].mxu0 %v1688
        %v1810 = vpop.f32.mrb[0].mxu0
        %v1811 = vadd.f32 0.0, %v1810
        %v1812 = vpop.f32.mrb[0].mxu0
        %1813 = vmatprep.mubr.f32.mxu0 %v1691
        %1814 = vmatmul.mubr.f32.gmra.mrb[0].mxu0 %v1690
        %v1815 = vpop.f32.mrb[0].mxu0
        %v1816 = vadd.f32 0.0, %v1815
        %v1817 = vpop.f32.mrb[0].mxu0
        %1818 = vmatprep.mubr.f32.mxu0 %v1693
        %1819 = vmatmul.mubr.f32.gmra.mrb[0].mxu0 %v1692
        %v1820 = vpop.f32.mrb[0].mxu0
        %v1821 = vadd.f32 0.0, %v1820
        %v1822 = vpop.f32.mrb[0].mxu0
        %1823 = vmatprep.mubr.f32.mxu0 %v1695
        %1824 = vmatmul.mubr.f32.gmra.mrb[0].mxu0 %v1694
        %v1825 = vpop.f32.mrb[0].mxu0
        %v1826 = vadd.f32 0.0, %v1825
        %v1827 = vpop.f32.mrb[0].mxu0
        %1828 = vmatprep.mubr.f32.mxu0 %v1697
        %1829 = vmatmul.mubr.f32.gmra.mrb[0].mxu0 %v1696
        %v1830 = vpop.f32.mrb[0].mxu0
        %v1831 = vadd.f32 0.0, %v1830
        %v1832 = vpop.f32.mrb[0].mxu0
        %1833 = vmatprep.mubr.f32.mxu0 %v1699
        %1834 = vmatmul.mubr.f32.gmra.mrb[0].mxu0 %v1698
        %v1835 = vpop.f32.mrb[0].mxu0
        %v1836 = vadd.f32 0.0, %v1835
        %v1837 = vpop.f32.mrb[0].mxu0
        %1838 = vmatprep.mubr.f32.mxu0 %v1701
        %1839 = vmatmul.mubr.f32.gmra.mrb[0].mxu0 %v1700
        %v1840 = vpop.f32.mrb[0].mxu0
        %v1841 = vadd.f32 0.0, %v1840
        %v1842 = vpop.f32.mrb[0].mxu0
        %1843 = vmatprep.mubr.f32.mxu0 %v1703
        %1844 = vmatmul.mubr.f32.gmra.mrb[0].mxu0 %v1702
        %v1845 = vpop.f32.mrb[0].mxu0
        %v1846 = vadd.f32 0.0, %v1845
        %v1847 = vpop.f32.mrb[0].mxu0
        %1848 = vdwg.mxu0
        %v1849 = vsub.f32 %v955, %v1771
        %v1850 = vsub.f32 %v960, %v1776
        %v1851 = vsub.f32 %v965, %v1781
        %v1852 = vsub.f32 %v970, %v1786
        %v1853 = vsub.f32 %v975, %v1791
        %v1854 = vsub.f32 %v980, %v1796
        %v1855 = vsub.f32 %v985, %v1801
        %v1856 = vsub.f32 %v990, %v1806
        %v1857 = vsub.f32 %v995, %v1811
        %v1858 = vsub.f32 %v1000, %v1816
        %v1859 = vsub.f32 %v1005, %v1821
        %v1860 = vsub.f32 %v1010, %v1826
        %v1861 = vsub.f32 %v1015, %v1831
        %v1862 = vsub.f32 %v1020, %v1836
        %v1863 = vsub.f32 %v1025, %v1841
        %v1864 = vsub.f32 %v1030, %v1846
        %v1865 = vmul.f32 %v1849, %v1849
        %v1866 = vmul.f32 %v1850, %v1850
        %v1867 = vmul.f32 %v1851, %v1851
        %v1868 = vmul.f32 %v1852, %v1852
        %v1869 = vmul.f32 %v1853, %v1853
        %v1870 = vmul.f32 %v1854, %v1854
        %v1871 = vmul.f32 %v1855, %v1855
        %v1872 = vmul.f32 %v1856, %v1856
        %v1873 = vmul.f32 %v1857, %v1857
        %v1874 = vmul.f32 %v1858, %v1858
        %v1875 = vmul.f32 %v1859, %v1859
        %v1876 = vmul.f32 %v1860, %v1860
        %v1877 = vmul.f32 %v1861, %v1861
        %v1878 = vmul.f32 %v1862, %v1862
        %v1879 = vmul.f32 %v1863, %v1863
        %v1880 = vmul.f32 %v1864, %v1864
        %1881 = vadd.xlane.f32.xlu0 %v1865
        %v1882 = vpop.xlane.xlu0 %1881
        %1883 = vadd.xlane.f32.xlu0 %v1866
        %v1884 = vpop.xlane.xlu0 %1883
        %1885 = vadd.xlane.f32.xlu0 %v1867
        %v1886 = vpop.xlane.xlu0 %1885
        %1887 = vadd.xlane.f32.xlu0 %v1868
        %v1888 = vpop.xlane.xlu0 %1887
        %1889 = vadd.xlane.f32.xlu0 %v1869
        %v1890 = vpop.xlane.xlu0 %1889
        %1891 = vadd.xlane.f32.xlu0 %v1870
        %v1892 = vpop.xlane.xlu0 %1891
        %1893 = vadd.xlane.f32.xlu0 %v1871
        %v1894 = vpop.xlane.xlu0 %1893
        %1895 = vadd.xlane.f32.xlu0 %v1872
        %v1896 = vpop.xlane.xlu0 %1895
        %1897 = vadd.xlane.f32.xlu0 %v1873
        %v1898 = vpop.xlane.xlu0 %1897
        %1899 = vadd.xlane.f32.xlu0 %v1874
        %v1900 = vpop.xlane.xlu0 %1899
        %1901 = vadd.xlane.f32.xlu0 %v1875
        %v1902 = vpop.xlane.xlu0 %1901
        %1903 = vadd.xlane.f32.xlu0 %v1876
        %v1904 = vpop.xlane.xlu0 %1903
        %1905 = vadd.xlane.f32.xlu0 %v1877
        %v1906 = vpop.xlane.xlu0 %1905
        %1907 = vadd.xlane.f32.xlu0 %v1878
        %v1908 = vpop.xlane.xlu0 %1907
        %1909 = vadd.xlane.f32.xlu0 %v1879
        %v1910 = vpop.xlane.xlu0 %1909
        %1911 = vadd.xlane.f32.xlu0 %v1880
        %v1912 = vpop.xlane.xlu0 %1911
        %v1913 = vlaneseq
        %v1914 = vshrl.u32 %v1913, 7
        %v1915 = vsub.s32 0, %v1914
        %v1916 = vrot.slane %v272, %v1915
        %1917 = vmatprep.subr.mxu0 0.0
        %1918 = vmatpush1.msra.mxu0 %v256
        %1919 = vmatprep.subr.mxu0 0.0
        %1920 = vmatpush1.msra.mxu0 %v257
        %1921 = vmatprep.subr.mxu0 0.0
        %1922 = vmatpush1.msra.mxu0 %v258
        %1923 = vmatprep.subr.mxu0 0.0
        %1924 = vmatpush1.msra.mxu0 %v259
        %1925 = vmatprep.subr.mxu0 0.0
        %1926 = vmatpush1.msra.mxu0 %v260
        %1927 = vmatprep.subr.mxu0 0.0
        %1928 = vmatpush1.msra.mxu0 %v261
        %1929 = vmatprep.subr.mxu0 0.0
        %1930 = vmatpush1.msra.mxu0 %v262
        %1931 = vmatprep.subr.mxu0 0.0
        %1932 = vmatpush1.msra.mxu0 %v263
        %1933 = vmatprep.subr.mxu0 0.0
        %1934 = vmatpush1.msra.mxu0 %v264
        %1935 = vmatprep.subr.mxu0 0.0
        %1936 = vmatpush1.msra.mxu0 %v265
        %1937 = vmatprep.subr.mxu0 0.0
        %1938 = vmatpush1.msra.mxu0 %v266
        %1939 = vmatprep.subr.mxu0 0.0
        %1940 = vmatpush1.msra.mxu0 %v267
        %1941 = vmatprep.subr.mxu0 0.0
        %1942 = vmatpush1.msra.mxu0 %v268
        %1943 = vmatprep.subr.mxu0 0.0
        %1944 = vmatpush1.msra.mxu0 %v269
        %1945 = vmatprep.subr.mxu0 0.0
        %1946 = vmatpush1.msra.mxu0 %v270
        %1947 = vmatprep.subr.mxu0 0.0
        %1948 = vmatpush1.msra.mxu0 %v271
        %1949 = vmatprep.subr.mxu0 0.0
        %1950 = vmatpush1.msra.mxu0 0.0
        %1951 = vmatprep.subr.mxu0 0.0
        %1952 = vmatpush1.msra.mxu0 0.0
        %1953 = vmatprep.subr.mxu0 0.0
        %1954 = vmatpush1.msra.mxu0 0.0
        %1955 = vmatprep.subr.mxu0 0.0
        %1956 = vmatpush1.msra.mxu0 0.0
        %1957 = vmatprep.subr.mxu0 0.0
        %1958 = vmatpush1.msra.mxu0 0.0
        %1959 = vmatprep.subr.mxu0 0.0
        %1960 = vmatpush1.msra.mxu0 0.0
        %1961 = vmatprep.subr.mxu0 0.0
        %1962 = vmatpush1.msra.mxu0 0.0
        %1963 = vmatprep.subr.mxu0 0.0
        %1964 = vmatpush1.msra.mxu0 0.0
        %1965 = vmatprep.subr.mxu0 0.0
        %1966 = vmatpush1.msra.mxu0 0.0
        %1967 = vmatprep.subr.mxu0 0.0
        %1968 = vmatpush1.msra.mxu0 0.0
        %1969 = vmatprep.subr.mxu0 0.0
        %1970 = vmatpush1.msra.mxu0 0.0
        %1971 = vmatprep.subr.mxu0 0.0
        %1972 = vmatpush1.msra.mxu0 0.0
        %1973 = vmatprep.subr.mxu0 0.0
        %1974 = vmatpush1.msra.mxu0 0.0
        %1975 = vmatprep.subr.mxu0 0.0
        %1976 = vmatpush1.msra.mxu0 0.0
        %1977 = vmatprep.subr.mxu0 0.0
        %1978 = vmatpush1.msra.mxu0 0.0
        %1979 = vmatprep.subr.mxu0 0.0
        %1980 = vmatpush1.msra.mxu0 0.0
        %1981 = vmatprep.mubr.f32.mxu0 0.0
        %1982 = vmatmul.mubr.f32.gmra.mrb[0].mxu0 %v1771
        %v1983 = vpop.f32.mrb[0].mxu0
        %v1984 = vadd.f32 %v1916, %v1983
        %v1985 = vpop.f32.mrb[0].mxu0
        %1986 = vmatprep.mubr.f32.mxu0 0.0
        %1987 = vmatmul.mubr.f32.gmra.mrb[0].mxu0 %v1776
        %v1988 = vpop.f32.mrb[0].mxu0
        %v1989 = vadd.f32 %v1916, %v1988
        %v1990 = vpop.f32.mrb[0].mxu0
        %1991 = vmatprep.mubr.f32.mxu0 0.0
        %1992 = vmatmul.mubr.f32.gmra.mrb[0].mxu0 %v1781
        %v1993 = vpop.f32.mrb[0].mxu0
        %v1994 = vadd.f32 %v1916, %v1993
        %v1995 = vpop.f32.mrb[0].mxu0
        %1996 = vmatprep.mubr.f32.mxu0 0.0
        %1997 = vmatmul.mubr.f32.gmra.mrb[0].mxu0 %v1786
        %v1998 = vpop.f32.mrb[0].mxu0
        %v1999 = vadd.f32 %v1916, %v1998
        %v2000 = vpop.f32.mrb[0].mxu0
        %2001 = vmatprep.mubr.f32.mxu0 0.0
        %2002 = vmatmul.mubr.f32.gmra.mrb[0].mxu0 %v1791
        %v2003 = vpop.f32.mrb[0].mxu0
        %v2004 = vadd.f32 %v1916, %v2003
        %v2005 = vpop.f32.mrb[0].mxu0
        %2006 = vmatprep.mubr.f32.mxu0 0.0
        %2007 = vmatmul.mubr.f32.gmra.mrb[0].mxu0 %v1796
        %v2008 = vpop.f32.mrb[0].mxu0
        %v2009 = vadd.f32 %v1916, %v2008
        %v2010 = vpop.f32.mrb[0].mxu0
        %2011 = vmatprep.mubr.f32.mxu0 0.0
        %2012 = vmatmul.mubr.f32.gmra.mrb[0].mxu0 %v1801
        %v2013 = vpop.f32.mrb[0].mxu0
        %v2014 = vadd.f32 %v1916, %v2013
        %v2015 = vpop.f32.mrb[0].mxu0
        %2016 = vmatprep.mubr.f32.mxu0 0.0
        %2017 = vmatmul.mubr.f32.gmra.mrb[0].mxu0 %v1806
        %v2018 = vpop.f32.mrb[0].mxu0
        %v2019 = vadd.f32 %v1916, %v2018
        %v2020 = vpop.f32.mrb[0].mxu0
        %2021 = vmatprep.mubr.f32.mxu0 0.0
        %2022 = vmatmul.mubr.f32.gmra.mrb[0].mxu0 %v1811
        %v2023 = vpop.f32.mrb[0].mxu0
        %v2024 = vadd.f32 %v1916, %v2023
        %v2025 = vpop.f32.mrb[0].mxu0
        %2026 = vmatprep.mubr.f32.mxu0 0.0
        %2027 = vmatmul.mubr.f32.gmra.mrb[0].mxu0 %v1816
        %v2028 = vpop.f32.mrb[0].mxu0
        %v2029 = vadd.f32 %v1916, %v2028
        %v2030 = vpop.f32.mrb[0].mxu0
        %2031 = vmatprep.mubr.f32.mxu0 0.0
        %2032 = vmatmul.mubr.f32.gmra.mrb[0].mxu0 %v1821
        %v2033 = vpop.f32.mrb[0].mxu0
        %v2034 = vadd.f32 %v1916, %v2033
        %v2035 = vpop.f32.mrb[0].mxu0
        %2036 = vmatprep.mubr.f32.mxu0 0.0
        %2037 = vmatmul.mubr.f32.gmra.mrb[0].mxu0 %v1826
        %v2038 = vpop.f32.mrb[0].mxu0
        %v2039 = vadd.f32 %v1916, %v2038
        %v2040 = vpop.f32.mrb[0].mxu0
        %2041 = vmatprep.mubr.f32.mxu0 0.0
        %2042 = vmatmul.mubr.f32.gmra.mrb[0].mxu0 %v1831
        %v2043 = vpop.f32.mrb[0].mxu0
        %v2044 = vadd.f32 %v1916, %v2043
        %v2045 = vpop.f32.mrb[0].mxu0
        %2046 = vmatprep.mubr.f32.mxu0 0.0
        %2047 = vmatmul.mubr.f32.gmra.mrb[0].mxu0 %v1836
        %v2048 = vpop.f32.mrb[0].mxu0
        %v2049 = vadd.f32 %v1916, %v2048
        %v2050 = vpop.f32.mrb[0].mxu0
        %2051 = vmatprep.mubr.f32.mxu0 0.0
        %2052 = vmatmul.mubr.f32.gmra.mrb[0].mxu0 %v1841
        %v2053 = vpop.f32.mrb[0].mxu0
        %v2054 = vadd.f32 %v1916, %v2053
        %v2055 = vpop.f32.mrb[0].mxu0
        %2056 = vmatprep.mubr.f32.mxu0 0.0
        %2057 = vmatmul.mubr.f32.gmra.mrb[0].mxu0 %v1846
        %v2058 = vpop.f32.mrb[0].mxu0
        %v2059 = vadd.f32 %v1916, %v2058
        %v2060 = vpop.f32.mrb[0].mxu0
        %2061 = vdwg.mxu0
        %v2062 = vmul.f32 %v1984, 0.5
        %v2063 = vmul.f32 %v1989, 0.5
        %v2064 = vmul.f32 %v1994, 0.5
        %v2065 = vmul.f32 %v1999, 0.5
        %v2066 = vmul.f32 %v2004, 0.5
        %v2067 = vmul.f32 %v2009, 0.5
        %v2068 = vmul.f32 %v2014, 0.5
        %v2069 = vmul.f32 %v2019, 0.5
        %v2070 = vmul.f32 %v2024, 0.5
        %v2071 = vmul.f32 %v2029, 0.5
        %v2072 = vmul.f32 %v2034, 0.5
        %v2073 = vmul.f32 %v2039, 0.5
        %v2074 = vmul.f32 %v2044, 0.5
        %v2075 = vmul.f32 %v2049, 0.5
        %v2076 = vmul.f32 %v2054, 0.5
        %v2077 = vmul.f32 %v2059, 0.5
        %v2078 = vmul.f32 %v1984, 0.70710677
        %v2079 = vmul.f32 %v1989, 0.70710677
        %v2080 = vmul.f32 %v1994, 0.70710677
        %v2081 = vmul.f32 %v1999, 0.70710677
        %v2082 = vmul.f32 %v2004, 0.70710677
        %v2083 = vmul.f32 %v2009, 0.70710677
        %v2084 = vmul.f32 %v2014, 0.70710677
        %v2085 = vmul.f32 %v2019, 0.70710677
        %v2086 = vmul.f32 %v2024, 0.70710677
        %v2087 = vmul.f32 %v2029, 0.70710677
        %v2088 = vmul.f32 %v2034, 0.70710677
        %v2089 = vmul.f32 %v2039, 0.70710677
        %v2090 = vmul.f32 %v2044, 0.70710677
        %v2091 = vmul.f32 %v2049, 0.70710677
        %v2092 = vmul.f32 %v2054, 0.70710677
        %v2093 = vmul.f32 %v2059, 0.70710677
        %v2094 = verf.f32.pop %v2078
        %v2095 = verf.f32.pop %v2079
        %v2096 = verf.f32.pop %v2080
        %v2097 = verf.f32.pop %v2081
        %v2098 = verf.f32.pop %v2082
        %v2099 = verf.f32.pop %v2083
        %v2100 = verf.f32.pop %v2084
        %v2101 = verf.f32.pop %v2085
        %v2102 = verf.f32.pop %v2086
        %v2103 = verf.f32.pop %v2087
        %v2104 = verf.f32.pop %v2088
        %v2105 = verf.f32.pop %v2089
        %v2106 = verf.f32.pop %v2090
        %v2107 = verf.f32.pop %v2091
        %v2108 = verf.f32.pop %v2092
        %v2109 = verf.f32.pop %v2093
        %v2110 = vadd.f32 %v2094, 1.0
        %v2111 = vadd.f32 %v2095, 1.0
        %v2112 = vadd.f32 %v2096, 1.0
        %v2113 = vadd.f32 %v2097, 1.0
        %v2114 = vadd.f32 %v2098, 1.0
        %v2115 = vadd.f32 %v2099, 1.0
        %v2116 = vadd.f32 %v2100, 1.0
        %v2117 = vadd.f32 %v2101, 1.0
        %v2118 = vadd.f32 %v2102, 1.0
        %v2119 = vadd.f32 %v2103, 1.0
        %v2120 = vadd.f32 %v2104, 1.0
        %v2121 = vadd.f32 %v2105, 1.0
        %v2122 = vadd.f32 %v2106, 1.0
        %v2123 = vadd.f32 %v2107, 1.0
        %v2124 = vadd.f32 %v2108, 1.0
        %v2125 = vadd.f32 %v2109, 1.0
        %v2126 = vmul.f32 %v2062, %v2110
        %v2127 = vmul.f32 %v2063, %v2111
        %v2128 = vmul.f32 %v2064, %v2112
        %v2129 = vmul.f32 %v2065, %v2113
        %v2130 = vmul.f32 %v2066, %v2114
        %v2131 = vmul.f32 %v2067, %v2115
        %v2132 = vmul.f32 %v2068, %v2116
        %v2133 = vmul.f32 %v2069, %v2117
        %v2134 = vmul.f32 %v2070, %v2118
        %v2135 = vmul.f32 %v2071, %v2119
        %v2136 = vmul.f32 %v2072, %v2120
        %v2137 = vmul.f32 %v2073, %v2121
        %v2138 = vmul.f32 %v2074, %v2122
        %v2139 = vmul.f32 %v2075, %v2123
        %v2140 = vmul.f32 %v2076, %v2124
        %v2141 = vmul.f32 %v2077, %v2125
        %v2142 = vlaneseq
        %v2143 = vshrl.u32 %v2142, 7
        %v2144 = vsub.s32 0, %v2143
        %v2145 = vrot.slane %v289, %v2144
        %2146 = vmatprep.subr.mxu0 0.0
        %2147 = vmatpush1.msra.mxu0 %v273
        %2148 = vmatprep.subr.mxu0 0.0
        %2149 = vmatpush1.msra.mxu0 %v274
        %2150 = vmatprep.subr.mxu0 0.0
        %2151 = vmatpush1.msra.mxu0 %v275
        %2152 = vmatprep.subr.mxu0 0.0
        %2153 = vmatpush1.msra.mxu0 %v276
        %2154 = vmatprep.subr.mxu0 0.0
        %2155 = vmatpush1.msra.mxu0 %v277
        %2156 = vmatprep.subr.mxu0 0.0
        %2157 = vmatpush1.msra.mxu0 %v278
        %2158 = vmatprep.subr.mxu0 0.0
        %2159 = vmatpush1.msra.mxu0 %v279
        %2160 = vmatprep.subr.mxu0 0.0
        %2161 = vmatpush1.msra.mxu0 %v280
        %2162 = vmatprep.subr.mxu0 0.0
        %2163 = vmatpush1.msra.mxu0 %v281
        %2164 = vmatprep.subr.mxu0 0.0
        %2165 = vmatpush1.msra.mxu0 %v282
        %2166 = vmatprep.subr.mxu0 0.0
        %2167 = vmatpush1.msra.mxu0 %v283
        %2168 = vmatprep.subr.mxu0 0.0
        %2169 = vmatpush1.msra.mxu0 %v284
        %2170 = vmatprep.subr.mxu0 0.0
        %2171 = vmatpush1.msra.mxu0 %v285
        %2172 = vmatprep.subr.mxu0 0.0
        %2173 = vmatpush1.msra.mxu0 %v286
        %2174 = vmatprep.subr.mxu0 0.0
        %2175 = vmatpush1.msra.mxu0 %v287
        %2176 = vmatprep.subr.mxu0 0.0
        %2177 = vmatpush1.msra.mxu0 %v288
        %2178 = vmatprep.subr.mxu0 0.0
        %2179 = vmatpush1.msra.mxu0 0.0
        %2180 = vmatprep.subr.mxu0 0.0
        %2181 = vmatpush1.msra.mxu0 0.0
        %2182 = vmatprep.subr.mxu0 0.0
        %2183 = vmatpush1.msra.mxu0 0.0
        %2184 = vmatprep.subr.mxu0 0.0
        %2185 = vmatpush1.msra.mxu0 0.0
        %2186 = vmatprep.subr.mxu0 0.0
        %2187 = vmatpush1.msra.mxu0 0.0
        %2188 = vmatprep.subr.mxu0 0.0
        %2189 = vmatpush1.msra.mxu0 0.0
        %2190 = vmatprep.subr.mxu0 0.0
        %2191 = vmatpush1.msra.mxu0 0.0
        %2192 = vmatprep.subr.mxu0 0.0
        %2193 = vmatpush1.msra.mxu0 0.0
        %2194 = vmatprep.subr.mxu0 0.0
        %2195 = vmatpush1.msra.mxu0 0.0
        %2196 = vmatprep.subr.mxu0 0.0
        %2197 = vmatpush1.msra.mxu0 0.0
        %2198 = vmatprep.subr.mxu0 0.0
        %2199 = vmatpush1.msra.mxu0 0.0
        %2200 = vmatprep.subr.mxu0 0.0
        %2201 = vmatpush1.msra.mxu0 0.0
        %2202 = vmatprep.subr.mxu0 0.0
        %2203 = vmatpush1.msra.mxu0 0.0
        %2204 = vmatprep.subr.mxu0 0.0
        %2205 = vmatpush1.msra.mxu0 0.0
        %2206 = vmatprep.subr.mxu0 0.0
        %2207 = vmatpush1.msra.mxu0 0.0
        %2208 = vmatprep.subr.mxu0 0.0
        %2209 = vmatpush1.msra.mxu0 0.0
        %2210 = vmatprep.mubr.f32.mxu0 0.0
        %2211 = vmatmul.mubr.f32.gmra.mrb[0].mxu0 %v2126
        %v2212 = vpop.f32.mrb[0].mxu0
        %v2213 = vadd.f32 %v2145, %v2212
        %v2214 = vpop.f32.mrb[0].mxu0
        %2215 = vmatprep.mubr.f32.mxu0 0.0
        %2216 = vmatmul.mubr.f32.gmra.mrb[0].mxu0 %v2127
        %v2217 = vpop.f32.mrb[0].mxu0
        %v2218 = vadd.f32 %v2145, %v2217
        %v2219 = vpop.f32.mrb[0].mxu0
        %2220 = vmatprep.mubr.f32.mxu0 0.0
        %2221 = vmatmul.mubr.f32.gmra.mrb[0].mxu0 %v2128
        %v2222 = vpop.f32.mrb[0].mxu0
        %v2223 = vadd.f32 %v2145, %v2222
        %v2224 = vpop.f32.mrb[0].mxu0
        %2225 = vmatprep.mubr.f32.mxu0 0.0
        %2226 = vmatmul.mubr.f32.gmra.mrb[0].mxu0 %v2129
        %v2227 = vpop.f32.mrb[0].mxu0
        %v2228 = vadd.f32 %v2145, %v2227
        %v2229 = vpop.f32.mrb[0].mxu0
        %2230 = vmatprep.mubr.f32.mxu0 0.0
        %2231 = vmatmul.mubr.f32.gmra.mrb[0].mxu0 %v2130
        %v2232 = vpop.f32.mrb[0].mxu0
        %v2233 = vadd.f32 %v2145, %v2232
        %v2234 = vpop.f32.mrb[0].mxu0
        %2235 = vmatprep.mubr.f32.mxu0 0.0
        %2236 = vmatmul.mubr.f32.gmra.mrb[0].mxu0 %v2131
        %v2237 = vpop.f32.mrb[0].mxu0
        %v2238 = vadd.f32 %v2145, %v2237
        %v2239 = vpop.f32.mrb[0].mxu0
        %2240 = vmatprep.mubr.f32.mxu0 0.0
        %2241 = vmatmul.mubr.f32.gmra.mrb[0].mxu0 %v2132
        %v2242 = vpop.f32.mrb[0].mxu0
        %v2243 = vadd.f32 %v2145, %v2242
        %v2244 = vpop.f32.mrb[0].mxu0
        %2245 = vmatprep.mubr.f32.mxu0 0.0
        %2246 = vmatmul.mubr.f32.gmra.mrb[0].mxu0 %v2133
        %v2247 = vpop.f32.mrb[0].mxu0
        %v2248 = vadd.f32 %v2145, %v2247
        %v2249 = vpop.f32.mrb[0].mxu0
        %2250 = vmatprep.mubr.f32.mxu0 0.0
        %2251 = vmatmul.mubr.f32.gmra.mrb[0].mxu0 %v2134
        %v2252 = vpop.f32.mrb[0].mxu0
        %v2253 = vadd.f32 %v2145, %v2252
        %v2254 = vpop.f32.mrb[0].mxu0
        %2255 = vmatprep.mubr.f32.mxu0 0.0
        %2256 = vmatmul.mubr.f32.gmra.mrb[0].mxu0 %v2135
        %v2257 = vpop.f32.mrb[0].mxu0
        %v2258 = vadd.f32 %v2145, %v2257
        %v2259 = vpop.f32.mrb[0].mxu0
        %2260 = vmatprep.mubr.f32.mxu0 0.0
        %2261 = vmatmul.mubr.f32.gmra.mrb[0].mxu0 %v2136
        %v2262 = vpop.f32.mrb[0].mxu0
        %v2263 = vadd.f32 %v2145, %v2262
        %v2264 = vpop.f32.mrb[0].mxu0
        %2265 = vmatprep.mubr.f32.mxu0 0.0
        %2266 = vmatmul.mubr.f32.gmra.mrb[0].mxu0 %v2137
        %v2267 = vpop.f32.mrb[0].mxu0
        %v2268 = vadd.f32 %v2145, %v2267
        %v2269 = vpop.f32.mrb[0].mxu0
        %2270 = vmatprep.mubr.f32.mxu0 0.0
        %2271 = vmatmul.mubr.f32.gmra.mrb[0].mxu0 %v2138
        %v2272 = vpop.f32.mrb[0].mxu0
        %v2273 = vadd.f32 %v2145, %v2272
        %v2274 = vpop.f32.mrb[0].mxu0
        %2275 = vmatprep.mubr.f32.mxu0 0.0
        %2276 = vmatmul.mubr.f32.gmra.mrb[0].mxu0 %v2139
        %v2277 = vpop.f32.mrb[0].mxu0
        %v2278 = vadd.f32 %v2145, %v2277
        %v2279 = vpop.f32.mrb[0].mxu0
        %2280 = vmatprep.mubr.f32.mxu0 0.0
        %2281 = vmatmul.mubr.f32.gmra.mrb[0].mxu0 %v2140
        %v2282 = vpop.f32.mrb[0].mxu0
        %v2283 = vadd.f32 %v2145, %v2282
        %v2284 = vpop.f32.mrb[0].mxu0
        %2285 = vmatprep.mubr.f32.mxu0 0.0
        %2286 = vmatmul.mubr.f32.gmra.mrb[0].mxu0 %v2141
        %v2287 = vpop.f32.mrb[0].mxu0
        %v2288 = vadd.f32 %v2145, %v2287
        %v2289 = vpop.f32.mrb[0].mxu0
        %2290 = vdwg.mxu0
        %v2291 = vmul.f32 %v2213, 0.5
        %v2292 = vmul.f32 %v2218, 0.5
        %v2293 = vmul.f32 %v2223, 0.5
        %v2294 = vmul.f32 %v2228, 0.5
        %v2295 = vmul.f32 %v2233, 0.5
        %v2296 = vmul.f32 %v2238, 0.5
        %v2297 = vmul.f32 %v2243, 0.5
        %v2298 = vmul.f32 %v2248, 0.5
        %v2299 = vmul.f32 %v2253, 0.5
        %v2300 = vmul.f32 %v2258, 0.5
        %v2301 = vmul.f32 %v2263, 0.5
        %v2302 = vmul.f32 %v2268, 0.5
        %v2303 = vmul.f32 %v2273, 0.5
        %v2304 = vmul.f32 %v2278, 0.5
        %v2305 = vmul.f32 %v2283, 0.5
        %v2306 = vmul.f32 %v2288, 0.5
        %v2307 = vmul.f32 %v2213, 0.70710677
        %v2308 = vmul.f32 %v2218, 0.70710677
        %v2309 = vmul.f32 %v2223, 0.70710677
        %v2310 = vmul.f32 %v2228, 0.70710677
        %v2311 = vmul.f32 %v2233, 0.70710677
        %v2312 = vmul.f32 %v2238, 0.70710677
        %v2313 = vmul.f32 %v2243, 0.70710677
        %v2314 = vmul.f32 %v2248, 0.70710677
        %v2315 = vmul.f32 %v2253, 0.70710677
        %v2316 = vmul.f32 %v2258, 0.70710677
        %v2317 = vmul.f32 %v2263, 0.70710677
        %v2318 = vmul.f32 %v2268, 0.70710677
        %v2319 = vmul.f32 %v2273, 0.70710677
        %v2320 = vmul.f32 %v2278, 0.70710677
        %v2321 = vmul.f32 %v2283, 0.70710677
        %v2322 = vmul.f32 %v2288, 0.70710677
        %v2323 = verf.f32.pop %v2307
        %v2324 = verf.f32.pop %v2308
        %v2325 = verf.f32.pop %v2309
        %v2326 = verf.f32.pop %v2310
        %v2327 = verf.f32.pop %v2311
        %v2328 = verf.f32.pop %v2312
        %v2329 = verf.f32.pop %v2313
        %v2330 = verf.f32.pop %v2314
        %v2331 = verf.f32.pop %v2315
        %v2332 = verf.f32.pop %v2316
        %v2333 = verf.f32.pop %v2317
        %v2334 = verf.f32.pop %v2318
        %v2335 = verf.f32.pop %v2319
        %v2336 = verf.f32.pop %v2320
        %v2337 = verf.f32.pop %v2321
        %v2338 = verf.f32.pop %v2322
        %v2339 = vadd.f32 %v2323, 1.0
        %v2340 = vadd.f32 %v2324, 1.0
        %v2341 = vadd.f32 %v2325, 1.0
        %v2342 = vadd.f32 %v2326, 1.0
        %v2343 = vadd.f32 %v2327, 1.0
        %v2344 = vadd.f32 %v2328, 1.0
        %v2345 = vadd.f32 %v2329, 1.0
        %v2346 = vadd.f32 %v2330, 1.0
        %v2347 = vadd.f32 %v2331, 1.0
        %v2348 = vadd.f32 %v2332, 1.0
        %v2349 = vadd.f32 %v2333, 1.0
        %v2350 = vadd.f32 %v2334, 1.0
        %v2351 = vadd.f32 %v2335, 1.0
        %v2352 = vadd.f32 %v2336, 1.0
        %v2353 = vadd.f32 %v2337, 1.0
        %v2354 = vadd.f32 %v2338, 1.0
        %v2355 = vmul.f32 %v2291, %v2339
        %v2356 = vmul.f32 %v2292, %v2340
        %v2357 = vmul.f32 %v2293, %v2341
        %v2358 = vmul.f32 %v2294, %v2342
        %v2359 = vmul.f32 %v2295, %v2343
        %v2360 = vmul.f32 %v2296, %v2344
        %v2361 = vmul.f32 %v2297, %v2345
        %v2362 = vmul.f32 %v2298, %v2346
        %v2363 = vmul.f32 %v2299, %v2347
        %v2364 = vmul.f32 %v2300, %v2348
        %v2365 = vmul.f32 %v2301, %v2349
        %v2366 = vmul.f32 %v2302, %v2350
        %v2367 = vmul.f32 %v2303, %v2351
        %v2368 = vmul.f32 %v2304, %v2352
        %v2369 = vmul.f32 %v2305, %v2353
        %v2370 = vmul.f32 %v2306, %v2354
        %v2371 = vlaneseq
        %v2372 = vshrl.u32 %v2371, 7
        %v2373 = vsub.s32 0, %v2372
        %v2374 = vrot.slane %v306, %v2373
        %2375 = vmatprep.subr.mxu0 0.0
        %2376 = vmatpush1.msra.mxu0 %v290
        %2377 = vmatprep.subr.mxu0 0.0
        %2378 = vmatpush1.msra.mxu0 %v291
        %2379 = vmatprep.subr.mxu0 0.0
        %2380 = vmatpush1.msra.mxu0 %v292
        %2381 = vmatprep.subr.mxu0 0.0
        %2382 = vmatpush1.msra.mxu0 %v293
        %2383 = vmatprep.subr.mxu0 0.0
        %2384 = vmatpush1.msra.mxu0 %v294
        %2385 = vmatprep.subr.mxu0 0.0
        %2386 = vmatpush1.msra.mxu0 %v295
        %2387 = vmatprep.subr.mxu0 0.0
        %2388 = vmatpush1.msra.mxu0 %v296
        %2389 = vmatprep.subr.mxu0 0.0
        %2390 = vmatpush1.msra.mxu0 %v297
        %2391 = vmatprep.subr.mxu0 0.0
        %2392 = vmatpush1.msra.mxu0 %v298
        %2393 = vmatprep.subr.mxu0 0.0
        %2394 = vmatpush1.msra.mxu0 %v299
        %2395 = vmatprep.subr.mxu0 0.0
        %2396 = vmatpush1.msra.mxu0 %v300
        %2397 = vmatprep.subr.mxu0 0.0
        %2398 = vmatpush1.msra.mxu0 %v301
        %2399 = vmatprep.subr.mxu0 0.0
        %2400 = vmatpush1.msra.mxu0 %v302
        %2401 = vmatprep.subr.mxu0 0.0
        %2402 = vmatpush1.msra.mxu0 %v303
        %2403 = vmatprep.subr.mxu0 0.0
        %2404 = vmatpush1.msra.mxu0 %v304
        %2405 = vmatprep.subr.mxu0 0.0
        %2406 = vmatpush1.msra.mxu0 %v305
        %2407 = vmatprep.subr.mxu0 0.0
        %2408 = vmatpush1.msra.mxu0 0.0
        %2409 = vmatprep.subr.mxu0 0.0
        %2410 = vmatpush1.msra.mxu0 0.0
        %2411 = vmatprep.subr.mxu0 0.0
        %2412 = vmatpush1.msra.mxu0 0.0
        %2413 = vmatprep.subr.mxu0 0.0
        %2414 = vmatpush1.msra.mxu0 0.0
        %2415 = vmatprep.subr.mxu0 0.0
        %2416 = vmatpush1.msra.mxu0 0.0
        %2417 = vmatprep.subr.mxu0 0.0
        %2418 = vmatpush1.msra.mxu0 0.0
        %2419 = vmatprep.subr.mxu0 0.0
        %2420 = vmatpush1.msra.mxu0 0.0
        %2421 = vmatprep.subr.mxu0 0.0
        %2422 = vmatpush1.msra.mxu0 0.0
        %2423 = vmatprep.subr.mxu0 0.0
        %2424 = vmatpush1.msra.mxu0 0.0
        %2425 = vmatprep.subr.mxu0 0.0
        %2426 = vmatpush1.msra.mxu0 0.0
        %2427 = vmatprep.subr.mxu0 0.0
        %2428 = vmatpush1.msra.mxu0 0.0
        %2429 = vmatprep.subr.mxu0 0.0
        %2430 = vmatpush1.msra.mxu0 0.0
        %2431 = vmatprep.subr.mxu0 0.0
        %2432 = vmatpush1.msra.mxu0 0.0
        %2433 = vmatprep.subr.mxu0 0.0
        %2434 = vmatpush1.msra.mxu0 0.0
        %2435 = vmatprep.subr.mxu0 0.0
        %2436 = vmatpush1.msra.mxu0 0.0
        %2437 = vmatprep.subr.mxu0 0.0
        %2438 = vmatpush1.msra.mxu0 0.0
        %2439 = vmatprep.mubr.f32.mxu0 0.0
        %2440 = vmatmul.mubr.f32.gmra.mrb[0].mxu0 %v2355
        %v2441 = vpop.f32.mrb[0].mxu0
        %v2442 = vadd.f32 %v2374, %v2441
        %v2443 = vpop.f32.mrb[0].mxu0
        %2444 = vmatprep.mubr.f32.mxu0 0.0
        %2445 = vmatmul.mubr.f32.gmra.mrb[0].mxu0 %v2356
        %v2446 = vpop.f32.mrb[0].mxu0
        %v2447 = vadd.f32 %v2374, %v2446
        %v2448 = vpop.f32.mrb[0].mxu0
        %2449 = vmatprep.mubr.f32.mxu0 0.0
        %2450 = vmatmul.mubr.f32.gmra.mrb[0].mxu0 %v2357
        %v2451 = vpop.f32.mrb[0].mxu0
        %v2452 = vadd.f32 %v2374, %v2451
        %v2453 = vpop.f32.mrb[0].mxu0
        %2454 = vmatprep.mubr.f32.mxu0 0.0
        %2455 = vmatmul.mubr.f32.gmra.mrb[0].mxu0 %v2358
        %v2456 = vpop.f32.mrb[0].mxu0
        %v2457 = vadd.f32 %v2374, %v2456
        %v2458 = vpop.f32.mrb[0].mxu0
        %2459 = vmatprep.mubr.f32.mxu0 0.0
        %2460 = vmatmul.mubr.f32.gmra.mrb[0].mxu0 %v2359
        %v2461 = vpop.f32.mrb[0].mxu0
        %v2462 = vadd.f32 %v2374, %v2461
        %v2463 = vpop.f32.mrb[0].mxu0
        %2464 = vmatprep.mubr.f32.mxu0 0.0
        %2465 = vmatmul.mubr.f32.gmra.mrb[0].mxu0 %v2360
        %v2466 = vpop.f32.mrb[0].mxu0
        %v2467 = vadd.f32 %v2374, %v2466
        %v2468 = vpop.f32.mrb[0].mxu0
        %2469 = vmatprep.mubr.f32.mxu0 0.0
        %2470 = vmatmul.mubr.f32.gmra.mrb[0].mxu0 %v2361
        %v2471 = vpop.f32.mrb[0].mxu0
        %v2472 = vadd.f32 %v2374, %v2471
        %v2473 = vpop.f32.mrb[0].mxu0
        %2474 = vmatprep.mubr.f32.mxu0 0.0
        %2475 = vmatmul.mubr.f32.gmra.mrb[0].mxu0 %v2362
        %v2476 = vpop.f32.mrb[0].mxu0
        %v2477 = vadd.f32 %v2374, %v2476
        %v2478 = vpop.f32.mrb[0].mxu0
        %2479 = vmatprep.mubr.f32.mxu0 0.0
        %2480 = vmatmul.mubr.f32.gmra.mrb[0].mxu0 %v2363
        %v2481 = vpop.f32.mrb[0].mxu0
        %v2482 = vadd.f32 %v2374, %v2481
        %v2483 = vpop.f32.mrb[0].mxu0
        %2484 = vmatprep.mubr.f32.mxu0 0.0
        %2485 = vmatmul.mubr.f32.gmra.mrb[0].mxu0 %v2364
        %v2486 = vpop.f32.mrb[0].mxu0
        %v2487 = vadd.f32 %v2374, %v2486
        %v2488 = vpop.f32.mrb[0].mxu0
        %2489 = vmatprep.mubr.f32.mxu0 0.0
        %2490 = vmatmul.mubr.f32.gmra.mrb[0].mxu0 %v2365
        %v2491 = vpop.f32.mrb[0].mxu0
        %v2492 = vadd.f32 %v2374, %v2491
        %v2493 = vpop.f32.mrb[0].mxu0
        %2494 = vmatprep.mubr.f32.mxu0 0.0
        %2495 = vmatmul.mubr.f32.gmra.mrb[0].mxu0 %v2366
        %v2496 = vpop.f32.mrb[0].mxu0
        %v2497 = vadd.f32 %v2374, %v2496
        %v2498 = vpop.f32.mrb[0].mxu0
        %2499 = vmatprep.mubr.f32.mxu0 0.0
        %2500 = vmatmul.mubr.f32.gmra.mrb[0].mxu0 %v2367
        %v2501 = vpop.f32.mrb[0].mxu0
        %v2502 = vadd.f32 %v2374, %v2501
        %v2503 = vpop.f32.mrb[0].mxu0
        %2504 = vmatprep.mubr.f32.mxu0 0.0
        %2505 = vmatmul.mubr.f32.gmra.mrb[0].mxu0 %v2368
        %v2506 = vpop.f32.mrb[0].mxu0
        %v2507 = vadd.f32 %v2374, %v2506
        %v2508 = vpop.f32.mrb[0].mxu0
        %2509 = vmatprep.mubr.f32.mxu0 0.0
        %2510 = vmatmul.mubr.f32.gmra.mrb[0].mxu0 %v2369
        %v2511 = vpop.f32.mrb[0].mxu0
        %v2512 = vadd.f32 %v2374, %v2511
        %v2513 = vpop.f32.mrb[0].mxu0
        %2514 = vmatprep.mubr.f32.mxu0 0.0
        %2515 = vmatmul.mubr.f32.gmra.mrb[0].mxu0 %v2370
        %v2516 = vpop.f32.mrb[0].mxu0
        %v2517 = vadd.f32 %v2374, %v2516
        %v2518 = vpop.f32.mrb[0].mxu0
        %2519 = vdwg.mxu0
        %vm2520 = vcmp.eq.s32.totalorder %v1286, 4
        %v2521 = vsel %vm2520, %v1882, 0.0
        %v2522 = vsel %vm2520, %v1884, 0.0
        %v2523 = vsel %vm2520, %v1886, 0.0
        %v2524 = vsel %vm2520, %v1888, 0.0
        %v2525 = vsel %vm2520, %v1890, 0.0
        %v2526 = vsel %vm2520, %v1892, 0.0
        %v2527 = vsel %vm2520, %v1894, 0.0
        %v2528 = vsel %vm2520, %v1896, 0.0
        %v2529 = vsel %vm2520, %v1898, 0.0
        %v2530 = vsel %vm2520, %v1900, 0.0
        %v2531 = vsel %vm2520, %v1902, 0.0
        %v2532 = vsel %vm2520, %v1904, 0.0
        %v2533 = vsel %vm2520, %v1906, 0.0
        %v2534 = vsel %vm2520, %v1908, 0.0
        %v2535 = vsel %vm2520, %v1910, 0.0
        %v2536 = vsel %vm2520, %v1912, 0.0
        %v2537 = vadd.f32 %v2442, %v2521
        %v2538 = vadd.f32 %v2447, %v2522
        %v2539 = vadd.f32 %v2452, %v2523
        %v2540 = vadd.f32 %v2457, %v2524
        %v2541 = vadd.f32 %v2462, %v2525
        %v2542 = vadd.f32 %v2467, %v2526
        %v2543 = vadd.f32 %v2472, %v2527
        %v2544 = vadd.f32 %v2477, %v2528
        %v2545 = vadd.f32 %v2482, %v2529
        %v2546 = vadd.f32 %v2487, %v2530
        %v2547 = vadd.f32 %v2492, %v2531
        %v2548 = vadd.f32 %v2497, %v2532
        %v2549 = vadd.f32 %v2502, %v2533
        %v2550 = vadd.f32 %v2507, %v2534
        %v2551 = vadd.f32 %v2512, %v2535
        %v2552 = vadd.f32 %v2517, %v2536
        %2553 = vst [vmem:[%s202] sm:$0xff] %v2537
        %2554 = vst [vmem:[%s202 + $0x8] sm:$0xff] %v2538
        %2555 = vst [vmem:[%s202 + $0x10] sm:$0xff] %v2539
        %2556 = vst [vmem:[%s202 + $0x18] sm:$0xff] %v2540
        %2557 = vst [vmem:[%s202 + $0x20] sm:$0xff] %v2541
        %2558 = vst [vmem:[%s202 + $0x28] sm:$0xff] %v2542
        %2559 = vst [vmem:[%s202 + $0x30] sm:$0xff] %v2543
        %2560 = vst [vmem:[%s202 + $0x38] sm:$0xff] %v2544
        %2561 = vst [vmem:[%s202 + $0x40] sm:$0xff] %v2545
        %2562 = vst [vmem:[%s202 + $0x48] sm:$0xff] %v2546
        %2563 = vst [vmem:[%s202 + $0x50] sm:$0xff] %v2547
        %2564 = vst [vmem:[%s202 + $0x58] sm:$0xff] %v2548
        %2565 = vst [vmem:[%s202 + $0x60] sm:$0xff] %v2549
        %2566 = vst [vmem:[%s202 + $0x68] sm:$0xff] %v2550
        %2567 = vst [vmem:[%s202 + $0x70] sm:$0xff] %v2551
        %2568 = vst [vmem:[%s202 + $0x78] sm:$0xff] %v2552
        %s2569 = smul.u32 16, %s16
        %p2570 = scmp.lt.s32.totalorder %s2569, 31
        %s2571 = scalar_select %p2570, %s2569, 31
        %s2572 = smul.addr %s2571, 8
        %s2573 = scalar_lea.vmem %s3, %s2572
        // Predicated region
        $region41: #{vqvae_jet_forward.1} parent=31 // pred_check
          %p2574 = pneg %p102
        $region42: #{vqvae_jet_forward.1} parent=31 // pred_check_branch
          %2576 = sbr.rel (%p2574) target = $region44
        $region43: #{vqvae_jet_forward.1} parent=31 // pred_region
          %s2577 = smul.u32 16, %s16
        $region44: #{vqvae_jet_forward.1} parent=31 // pred_fallthru
          _
      $region32: #{vqvae_jet_forward.1} parent=5 // pred_fallthru
        _
      %p2578 = scmp.le.s32.totalorder 2, %s11
      // Predicated region
      $region45: #{vqvae_jet_forward.1} parent=5 // pred_check
        %p2579 = pneg %p2578
      $region46: #{vqvae_jet_forward.1} parent=5 // pred_check_branch
        %2581 = sbr.rel (%p2579) target = $region48
      $region47: #{vqvae_jet_forward.1} parent=5 // pred_region
        %s2582 = ssub.s32 %s11, 2
        // Predicated region
        $region49: #{vqvae_jet_forward.1} parent=47 // pred_check
          %p2583 = pneg %p108
        $region50: #{vqvae_jet_forward.1} parent=47 // pred_check_branch
          %2585 = sbr.rel (%p2583) target = $region52
        $region51: #{vqvae_jet_forward.1} parent=47 // pred_region
          %s2586 = smul.u32 16, %s17
          %p2587 = scmp.lt.s32.totalorder %s2586, 31
          %s2588 = scalar_select %p2587, %s2586, 31
          %s2589 = smul.addr %s2588, 8
          %s2590 = scalar_lea.vmem %s3, %s2589
        $region52: #{vqvae_jet_forward.1} parent=47 // pred_fallthru
          _
      $region48: #{vqvae_jet_forward.1} parent=5 // pred_fallthru
        _
    $region6: #{vqvae_jet_forward.1} parent=1 // loop_footer
      %s15 = sadd.s32 1, %s11
    $region7: #{vqvae_jet_forward.1} parent=1 // loop_footer_branch
      %10 = sbr.rel target = $region3
    $region8: #{vqvae_jet_forward.1} parent=1 // loop_exit
      _
    %2591 = vsyncpa [#allocation3], 1
    %s2592 = scalar_lea.sflag [#allocation3], 1
    %2593 = vsyncpa %s2592, 1
    %2594 = vsyncpa [#allocation5], 1

</llo_original>
